<compile_context>
chip_gen: v6e
topology: v6e:2x2x1
jax: 0.10.0
libtpu: 0.0.40
codegen_flags: <defaults>
</compile_context>

<pallas_src>
import jax
import jax.numpy as jnp
from jax.experimental import pallas as pl
from jax.experimental.pallas import tpu as pltpu

FEAT = 1280          # EfficientNet-b0 pooled feature dim
HID = 512
NUM_CLASSES = 10
OUT_PAD = 128        # lane-dense padded output width (>= NUM_CLASSES, multiple of 128)


def _round_up(x, m):
    return ((x + m - 1) // m) * m


def _cdiv(a, b):
    return (a + b - 1) // b


def _swish(x):
    # MemoryEfficientSwish forward == x * sigmoid(x); sigmoid lands on the EUP slot.
    return x * jax.nn.sigmoid(x)


def head_kernel(x_ref, w1_ref, b1_ref, w2_ref, b2_ref, o_ref):
    # x_ref : (TB, 1280) bf16     w1_ref: (1280, 512) bf16   b1_ref: (1, 512) f32
    # w2_ref: (512, 128) bf16     b2_ref: (1, 128)  f32      o_ref : (TB, 128) bf16
    #
    # bf16 x bf16 MXU matmuls with f32 accumulation (native fast path on
    # v5e/v6e/v7x); biases and swish in f32 for accuracy.
    h = jnp.dot(x_ref[...], w1_ref[...], preferred_element_type=jnp.float32)
    h = _swish(h + b1_ref[...])                                 # MemoryEfficientSwish
    y = jnp.dot(h.astype(jnp.bfloat16), w2_ref[...],
                preferred_element_type=jnp.float32)
    o_ref[...] = _swish(y + b2_ref[...]).astype(o_ref.dtype)    # MemoryEfficientSwish
    # padded columns (10..127) are swish(0) == 0; wrapper slices them away.


def baseline_head(x_bf16, w1_bf16, b1, w2_pad_bf16, b2_pad, *, batch_tile=1024):
    """Fused Pallas implementation of Baseline.base (eval mode).

    x_bf16       : (B, 1280) bf16 pooled features (from the extractor)
    w1_bf16      : (1280, 512) bf16
    b1           : (1, 512) f32
    w2_pad_bf16  : (512, 128) bf16, columns >= NUM_CLASSES are zero
    b2_pad       : (1, 128) f32, columns >= NUM_CLASSES are zero
    returns      : (B, NUM_CLASSES) f32
    """
    B = x_bf16.shape[0]

    # Balanced batch tiling: keep padding under 8 rows instead of a whole tile.
    if B <= batch_tile:
        TB = _round_up(B, 8)
        n_tiles = 1
    else:
        n_tiles = _cdiv(B, batch_tile)
        TB = _round_up(_cdiv(B, n_tiles), 8)
        n_tiles = _cdiv(B, TB)
    B_pad = TB * n_tiles
    if B_pad != B:
        x_bf16 = jnp.pad(x_bf16, ((0, B_pad - B), (0, 0)))

    grid = (n_tiles,)

    flops = 2 * B_pad * (FEAT * HID + HID * OUT_PAD)
    transcendentals = B_pad * (HID + OUT_PAD)            # one exp per swish element
    bytes_accessed = (
        B_pad * FEAT * 2                                  # x (bf16)
        + FEAT * HID * 2 + HID * 4                        # W1 (bf16) + b1 (f32)
        + HID * OUT_PAD * 2 + OUT_PAD * 4                 # W2 (bf16) + b2 (f32)
        + B_pad * OUT_PAD * 2                             # output (bf16)
    )

    out = pl.pallas_call(
        head_kernel,
        out_shape=jax.ShapeDtypeStruct((B_pad, OUT_PAD), jnp.bfloat16),
        grid=grid,
        in_specs=[
            pl.BlockSpec((TB, FEAT), lambda i: (i, 0)),        # batch tile (bf16)
            pl.BlockSpec((FEAT, HID), lambda i: (0, 0)),       # W1: VMEM-resident across tiles
            pl.BlockSpec((1, HID), lambda i: (0, 0)),          # b1
            pl.BlockSpec((HID, OUT_PAD), lambda i: (0, 0)),    # W2 (padded): resident
            pl.BlockSpec((1, OUT_PAD), lambda i: (0, 0)),      # b2 (padded)
        ],
        out_specs=pl.BlockSpec((TB, OUT_PAD), lambda i: (i, 0)),
        compiler_params=pltpu.CompilerParams(
            # Batch tiles are independent -> shard across the 2 TensorCores on v7x.
            dimension_semantics=("parallel",),
        ),
        cost_estimate=pl.CostEstimate(
            flops=flops,
            transcendentals=transcendentals,
            bytes_accessed=bytes_accessed,
        ),
    )(x_bf16, w1_bf16, b1, w2_pad_bf16, b2_pad)

    # Slice away batch padding + padded classes; upcast bf16 -> f32 for the caller.
    return out[:B, :NUM_CLASSES].astype(jnp.float32)


def init_params(key):
    """Deterministic param init mimicking torch.nn.Linear defaults
    (uniform(-1/sqrt(fan_in), +1/sqrt(fan_in))). Weights are returned in bf16
    (HBM-traffic / MXU-path optimization); biases in f32."""
    k1, k2, k3, k4 = jax.random.split(key, 4)
    bound1 = 1.0 / jnp.sqrt(FEAT)
    bound2 = 1.0 / jnp.sqrt(HID)
    w1 = jax.random.uniform(k1, (FEAT, HID), jnp.float32, -bound1, bound1)
    b1 = jax.random.uniform(k2, (1, HID), jnp.float32, -bound1, bound1)
    w2 = jax.random.uniform(k3, (HID, NUM_CLASSES), jnp.float32, -bound2, bound2)
    b2 = jax.random.uniform(k4, (1, NUM_CLASSES), jnp.float32, -bound2, bound2)

    w1_bf16 = w1.astype(jnp.bfloat16)
    # Zero-pad the classifier to a lane-dense 128-wide output.
    w2_pad = jnp.zeros((HID, OUT_PAD), jnp.float32).at[:, :NUM_CLASSES].set(w2)
    b2_pad = jnp.zeros((1, OUT_PAD), jnp.float32).at[:, :NUM_CLASSES].set(b2)
    w2_pad_bf16 = w2_pad.astype(jnp.bfloat16)
    return w1_bf16, b1, w2_pad_bf16, b2_pad


def reference_head(x_bf16, w1_bf16, b1, w2_pad_bf16, b2_pad):
    # Mirrors the kernel's numerics: bf16 operands, f32 accumulation, f32 swish.
    h = jnp.dot(x_bf16, w1_bf16, preferred_element_type=jnp.float32) + b1
    h = _swish(h)
    w2 = w2_pad_bf16[:, :NUM_CLASSES]
    b2 = b2_pad[:, :NUM_CLASSES]
    y = jnp.dot(h.astype(jnp.bfloat16), w2, preferred_element_type=jnp.float32) + b2
    return _swish(y)


if __name__ == "__main__":
    key = jax.random.PRNGKey(0)
    k_feat, k_params = jax.random.split(key)

    B = 8  # small batch, sublane-aligned
    # Stand-in for EfficientNet-b0 pooled features (see TODO above); consumed in bf16.
    x = jax.random.normal(k_feat, (B, FEAT), dtype=jnp.float32).astype(jnp.bfloat16)

    w1_bf16, b1, w2_pad_bf16, b2_pad = init_params(k_params)

    out = baseline_head(x, w1_bf16, b1, w2_pad_bf16, b2_pad)
    out = jax.block_until_ready(out)

    ref = reference_head(x, w1_bf16, b1, w2_pad_bf16, b2_pad)
    assert out.shape == (B, NUM_CLASSES)
    assert out.dtype == jnp.float32
    max_err = float(jnp.max(jnp.abs(out - ref)))
    assert jnp.allclose(out, ref, atol=1e-2, rtol=1e-2), f"mismatch vs reference (max err {max_err})"

    print("KERNEL_OK")
</pallas_src>

<mosaic_0001>
module attributes {stable_mosaic.version = 11 : i64} {
  func.func @head_kernel(%arg0: i32, %arg1: memref<8x1280xbf16, #tpu.memory_space<vmem>>, %arg2: memref<1280x512xbf16, #tpu.memory_space<vmem>>, %arg3: memref<1x512xf32, #tpu.memory_space<vmem>>, %arg4: memref<512x128xbf16, #tpu.memory_space<vmem>>, %arg5: memref<1x128xf32, #tpu.memory_space<vmem>>, %arg6: memref<8x128xbf16, #tpu.memory_space<vmem>>) attributes {dimension_semantics = [#tpu.dimension_semantics<parallel>], iteration_bounds = array<i64: 1>, scalar_prefetch = 0 : i64, scratch_operands = 0 : i64, tpu.core_type = #tpu.core_type<tc>, window_params = [{transform_indices = @transform_0, window_bounds = array<i64: 8, 1280>}, {pipeline_mode = #tpu.pipeline_mode<synchronous>, transform_indices = @transform_1, window_bounds = array<i64: 1280, 512>}, {pipeline_mode = #tpu.pipeline_mode<synchronous>, transform_indices = @transform_2, window_bounds = array<i64: 1, 512>}, {pipeline_mode = #tpu.pipeline_mode<synchronous>, transform_indices = @transform_3, window_bounds = array<i64: 512, 128>}, {pipeline_mode = #tpu.pipeline_mode<synchronous>, transform_indices = @transform_4, window_bounds = array<i64: 1, 128>}, {transform_indices = @transform_5, window_bounds = array<i64: 8, 128>}]} {
    %c0 = arith.constant 0 : index
    %c0_0 = arith.constant 0 : index
    %0 = vector.load %arg1[%c0, %c0_0] : memref<8x1280xbf16, #tpu.memory_space<vmem>>, vector<8x1280xbf16>
    %c0_1 = arith.constant 0 : index
    %c0_2 = arith.constant 0 : index
    %1 = vector.load %arg2[%c0_1, %c0_2] : memref<1280x512xbf16, #tpu.memory_space<vmem>>, vector<1280x512xbf16>
    %cst = arith.constant dense<0.000000e+00> : vector<8x512xf32>
    %2 = tpu.matmul %0, %1, %cst {dimension_numbers = #tpu.dot_dimension_numbers<[1], [0], [0], [1], [0, 0, 1, 1], [], []>} : vector<8x1280xbf16>, vector<1280x512xbf16>, vector<8x512xf32> -> vector<8x512xf32>
    %c0_3 = arith.constant 0 : index
    %c0_4 = arith.constant 0 : index
    %3 = vector.load %arg3[%c0_3, %c0_4] : memref<1x512xf32, #tpu.memory_space<vmem>>, vector<1x512xf32>
    %4 = vector.broadcast %3 : vector<1x512xf32> to vector<8x512xf32>
    %5 = arith.addf %2, %4 : vector<8x512xf32>
    %6 = arith.negf %5 : vector<8x512xf32>
    %7 = math.exp %6 : vector<8x512xf32>
    %cst_5 = arith.constant 1.000000e+00 : f32
    %8 = vector.broadcast %cst_5 : f32 to vector<8x512xf32>
    %9 = arith.addf %8, %7 : vector<8x512xf32>
    %10 = arith.divf %8, %9 : vector<8x512xf32>
    %11 = arith.mulf %5, %10 : vector<8x512xf32>
    %12 = arith.truncf %11 : vector<8x512xf32> to vector<8x512xbf16>
    %c0_6 = arith.constant 0 : index
    %c0_7 = arith.constant 0 : index
    %13 = vector.load %arg4[%c0_6, %c0_7] : memref<512x128xbf16, #tpu.memory_space<vmem>>, vector<512x128xbf16>
    %cst_8 = arith.constant dense<0.000000e+00> : vector<8x128xf32>
    %14 = tpu.matmul %12, %13, %cst_8 {dimension_numbers = #tpu.dot_dimension_numbers<[1], [0], [0], [1], [0, 0, 1, 1], [], []>} : vector<8x512xbf16>, vector<512x128xbf16>, vector<8x128xf32> -> vector<8x128xf32>
    %c0_9 = arith.constant 0 : index
    %c0_10 = arith.constant 0 : index
    %15 = vector.load %arg5[%c0_9, %c0_10] : memref<1x128xf32, #tpu.memory_space<vmem>>, vector<1x128xf32>
    %16 = vector.broadcast %15 : vector<1x128xf32> to vector<8x128xf32>
    %17 = arith.addf %14, %16 : vector<8x128xf32>
    %18 = arith.negf %17 : vector<8x128xf32>
    %19 = math.exp %18 : vector<8x128xf32>
    %cst_11 = arith.constant 1.000000e+00 : f32
    %20 = vector.broadcast %cst_11 : f32 to vector<8x128xf32>
    %21 = arith.addf %20, %19 : vector<8x128xf32>
    %22 = arith.divf %20, %21 : vector<8x128xf32>
    %23 = arith.mulf %17, %22 : vector<8x128xf32>
    %24 = arith.truncf %23 : vector<8x128xf32> to vector<8x128xbf16>
    %c0_12 = arith.constant 0 : index
    %c0_13 = arith.constant 0 : index
    %25 = vector.load %arg6[%c0_12, %c0_13] : memref<8x128xbf16, #tpu.memory_space<vmem>>, vector<8x128xbf16>
    tpu.vector_store %arg6[%c0_12, %c0_13], %24 {strides = array<i32>} : memref<8x128xbf16, #tpu.memory_space<vmem>>, vector<8x128xbf16>,
    return
  }
  func.func @transform_0(%arg0: i32) -> (i32, i32) {
    %c0_i32 = arith.constant 0 : i32
    %c0_i32_0 = arith.constant 0 : i32
    return %arg0, %c0_i32 : i32, i32
  }
  func.func @transform_1(%arg0: i32) -> (i32, i32) {
    %c0_i32 = arith.constant 0 : i32
    %c0_i32_0 = arith.constant 0 : i32
    %c0_i32_1 = arith.constant 0 : i32
    return %c0_i32, %c0_i32_0 : i32, i32
  }
  func.func @transform_2(%arg0: i32) -> (i32, i32) {
    %c0_i32 = arith.constant 0 : i32
    %c0_i32_0 = arith.constant 0 : i32
    %c0_i32_1 = arith.constant 0 : i32
    return %c0_i32, %c0_i32_0 : i32, i32
  }
  func.func @transform_3(%arg0: i32) -> (i32, i32) {
    %c0_i32 = arith.constant 0 : i32
    %c0_i32_0 = arith.constant 0 : i32
    %c0_i32_1 = arith.constant 0 : i32
    return %c0_i32, %c0_i32_0 : i32, i32
  }
  func.func @transform_4(%arg0: i32) -> (i32, i32) {
    %c0_i32 = arith.constant 0 : i32
    %c0_i32_0 = arith.constant 0 : i32
    %c0_i32_1 = arith.constant 0 : i32
    return %c0_i32, %c0_i32_0 : i32, i32
  }
  func.func @transform_5(%arg0: i32) -> (i32, i32) {
    %c0_i32 = arith.constant 0 : i32
    %c0_i32_0 = arith.constant 0 : i32
    return %arg0, %c0_i32 : i32, i32
  }
}

</mosaic_0001>

<llo_original>
// kernel: tpu_custom_call.1
$region0: #{tpu_custom_call.1}
  #allocation0 [shape = 'u32[]', space=smem, size = 0x4, offset = 0x4, fixed_abs, tag = 'smem constant byte address 0x4 - core index']
  #allocation1 [shape = 'u32[144,128]{1,0:T(1,128)}', space=vmem, size = 0x12000, scoped, tag = 'internal scratch']
  %s0 = inlined_call_operand.hbm [shape: bf16[8,1280], index: 0, kind: input, shape index: {}]
  %s1 = inlined_call_operand.hbm [shape: bf16[1280,512], index: 1, kind: input, shape index: {}]
  %s2 = inlined_call_operand.hbm [shape: f32[1,512], index: 2, kind: input, shape index: {}]
  %s3 = inlined_call_operand.hbm [shape: bf16[512,128], index: 3, kind: input, shape index: {}]
  %s4 = inlined_call_operand.hbm [shape: f32[1,128], index: 4, kind: input, shape index: {}]
  %s5 = inlined_call_operand.hbm [shape: bf16[8,128], index: 5, kind: output, shape index: {}]
  %s6 = sld [smem:[#allocation0]]
  $region50: #{tpu_custom_call.1} parent=0
    _
  %s8 = ssub.s32 1, %s6
  %s9 = scalar_select 0, %s8, %s6
  $region1: #{tpu_custom_call.1} parent=0
    #allocation2 [shape = 'u8[20480]{0}', space=vmem, size = 0x5000, scoped, tag = 'input window, operand 0, single buffered']
    #allocation3 [shape = 's32[1]{0}', space=sflag, size = 0x4, scoped, tag = 'scoped memory for tpu_custom_call.1']
    #allocation4 [shape = 's32[1]{0}', space=sflag, size = 0x4, scoped, tag = 'scoped memory for tpu_custom_call.1']
    #allocation5 [shape = 'u8[1310720]{0}', space=vmem, size = 0x140000, scoped, tag = 'input window, operand 1, single buffered']
    #allocation6 [shape = 's32[1]{0}', space=sflag, size = 0x4, scoped, tag = 'scoped memory for tpu_custom_call.1']
    #allocation7 [shape = 'u8[2048]{0}', space=vmem, size = 0x800, scoped, tag = 'input window, operand 2, single buffered']
    #allocation8 [shape = 'u8[131072]{0}', space=vmem, size = 0x20000, scoped, tag = 'input window, operand 3, single buffered']
    #allocation9 [shape = 's32[1]{0}', space=sflag, size = 0x4, scoped, tag = 'scoped memory for tpu_custom_call.1']
    #allocation10 [shape = 'u8[512]{0}', space=vmem, size = 0x400, scoped, tag = 'input window, operand 4, single buffered']
    #allocation11 [shape = 'u8[2048]{0}', space=vmem, size = 0x800, scoped, tag = 'output window, operand 0, single buffered']
    %10 = vsyncpa [#allocation3], 0
    %11 = vsyncpa [#allocation6], 0
    %12 = vsyncpa [#allocation9], 0
    %13 = vsyncpa [#allocation4], 0
    // Predicated region
    $region2: #{tpu_custom_call.1} parent=1 // pred_check
      _
    $region3: #{tpu_custom_call.1} parent=1 // pred_check_branch
      %15 = sbr.rel (0) target = $region5
    $region4: #{tpu_custom_call.1} parent=1 // pred_region
      %s17 = ssub.s32 640, 640
      %18 = vsyncadd [#allocation3], %s17
      %s20 = sshll.u32 [#allocation2], 4
      %s21 = int_to_ptr.vmem [resolvable:$true] %s20
      %23 = dma.hbm_to_vmem [thread:$0]  %s0, 640, %s21, [#allocation3]
    $region5: #{tpu_custom_call.1} parent=1 // pred_fallthru
      _
    // Predicated region
    $region6: #{tpu_custom_call.1} parent=1 // pred_check
      _
    $region7: #{tpu_custom_call.1} parent=1 // pred_check_branch
      %25 = sbr.rel (0) target = $region9
    $region8: #{tpu_custom_call.1} parent=1 // pred_region
      %s27 = ssub.s32 40960, 40960
      %28 = vsyncadd [#allocation6], %s27
      %s29 = sshll.u32 [#allocation5], 4
      %s30 = int_to_ptr.vmem [resolvable:$true] %s29
      %35 = dma.hbm_to_vmem [thread:$0]  %s1, 40960, %s30, [#allocation6], 256, 256, 16
    $region9: #{tpu_custom_call.1} parent=1 // pred_fallthru
      _
    // Predicated region
    $region10: #{tpu_custom_call.1} parent=1 // pred_check
      _
    $region11: #{tpu_custom_call.1} parent=1 // pred_check_branch
      %37 = sbr.rel (0) target = $region13
    $region12: #{tpu_custom_call.1} parent=1 // pred_region
      %s39 = ssub.s32 64, 64
      %40 = vsyncadd [#allocation6], %s39
      %s42 = sshll.u32 [#allocation7], 4
      %s43 = int_to_ptr.vmem [resolvable:$true] %s42
      %45 = dma.hbm_to_vmem [thread:$0]  %s2, 64, %s43, [#allocation6]
    $region13: #{tpu_custom_call.1} parent=1 // pred_fallthru
      _
    // Predicated region
    $region14: #{tpu_custom_call.1} parent=1 // pred_check
      _
    $region15: #{tpu_custom_call.1} parent=1 // pred_check_branch
      %47 = sbr.rel (0) target = $region17
    $region16: #{tpu_custom_call.1} parent=1 // pred_region
      %s49 = ssub.s32 4096, 4096
      %50 = vsyncadd [#allocation9], %s49
      %s51 = sshll.u32 [#allocation8], 4
      %s52 = int_to_ptr.vmem [resolvable:$true] %s51
      %57 = dma.hbm_to_vmem [thread:$0]  %s3, 4096, %s52, [#allocation9], 64, 64, 4
    $region17: #{tpu_custom_call.1} parent=1 // pred_fallthru
      _
    // Predicated region
    $region18: #{tpu_custom_call.1} parent=1 // pred_check
      _
    $region19: #{tpu_custom_call.1} parent=1 // pred_check_branch
      %59 = sbr.rel (0) target = $region21
    $region20: #{tpu_custom_call.1} parent=1 // pred_region
      %s61 = ssub.s32 16, 16
      %62 = vsyncadd [#allocation9], %s61
      %s64 = sshll.u32 [#allocation10], 4
      %s65 = int_to_ptr.vmem [resolvable:$true] %s64
      %67 = dma.hbm_to_vmem [thread:$0]  %s4, 16, %s65, [#allocation9]
    $region21: #{tpu_custom_call.1} parent=1 // pred_fallthru
      _
    // Predicated region
    $region22: #{tpu_custom_call.1} parent=1 // pred_check
      _
    $region23: #{tpu_custom_call.1} parent=1 // pred_check_branch
      %69 = sbr.rel (0) target = $region25
    $region24: #{tpu_custom_call.1} parent=1 // pred_region
      %70 = dma.done [#allocation3], 640
    $region25: #{tpu_custom_call.1} parent=1 // pred_fallthru
      _
    // Predicated region
    $region26: #{tpu_custom_call.1} parent=1 // pred_check
      _
    $region27: #{tpu_custom_call.1} parent=1 // pred_check_branch
      %72 = sbr.rel (0) target = $region29
    $region28: #{tpu_custom_call.1} parent=1 // pred_region
      %73 = dma.done [#allocation6], 40960
    $region29: #{tpu_custom_call.1} parent=1 // pred_fallthru
      _
    // Predicated region
    $region30: #{tpu_custom_call.1} parent=1 // pred_check
      _
    $region31: #{tpu_custom_call.1} parent=1 // pred_check_branch
      %75 = sbr.rel (0) target = $region33
    $region32: #{tpu_custom_call.1} parent=1 // pred_region
      %76 = dma.done [#allocation6], 64
    $region33: #{tpu_custom_call.1} parent=1 // pred_fallthru
      _
    // Predicated region
    $region34: #{tpu_custom_call.1} parent=1 // pred_check
      _
    $region35: #{tpu_custom_call.1} parent=1 // pred_check_branch
      %78 = sbr.rel (0) target = $region37
    $region36: #{tpu_custom_call.1} parent=1 // pred_region
      %79 = dma.done [#allocation9], 4096
    $region37: #{tpu_custom_call.1} parent=1 // pred_fallthru
      _
    // Predicated region
    $region38: #{tpu_custom_call.1} parent=1 // pred_check
      _
    $region39: #{tpu_custom_call.1} parent=1 // pred_check_branch
      %81 = sbr.rel (0) target = $region41
    $region40: #{tpu_custom_call.1} parent=1 // pred_region
      %82 = dma.done [#allocation9], 16
    $region41: #{tpu_custom_call.1} parent=1 // pred_fallthru
      _
    %v84 = vld [vmem:[#allocation2] sm:$0xff]
    %v85 = vld [vmem:[#allocation2 + $0x8] sm:$0xff]
    %v86 = vld [vmem:[#allocation2 + $0x10] sm:$0xff]
    %v87 = vld [vmem:[#allocation2 + $0x18] sm:$0xff]
    %v88 = vld [vmem:[#allocation2 + $0x20] sm:$0xff]
    %v89 = vld [vmem:[#allocation5] sm:$0xff]
    %v90 = vld [vmem:[#allocation5 + $0x8] sm:$0xff]
    %v91 = vld [vmem:[#allocation5 + $0x10] sm:$0xff]
    %v92 = vld [vmem:[#allocation5 + $0x18] sm:$0xff]
    %v93 = vld [vmem:[#allocation5 + $0x20] sm:$0xff]
    %v94 = vld [vmem:[#allocation5 + $0x28] sm:$0xff]
    %v95 = vld [vmem:[#allocation5 + $0x30] sm:$0xff]
    %v96 = vld [vmem:[#allocation5 + $0x38] sm:$0xff]
    %v97 = vld [vmem:[#allocation5 + $0x40] sm:$0xff]
    %v98 = vld [vmem:[#allocation5 + $0x48] sm:$0xff]
    %v99 = vld [vmem:[#allocation5 + $0x50] sm:$0xff]
    %v100 = vld [vmem:[#allocation5 + $0x58] sm:$0xff]
    %v101 = vld [vmem:[#allocation5 + $0x60] sm:$0xff]
    %v102 = vld [vmem:[#allocation5 + $0x68] sm:$0xff]
    %v103 = vld [vmem:[#allocation5 + $0x70] sm:$0xff]
    %v104 = vld [vmem:[#allocation5 + $0x78] sm:$0xff]
    %v105 = vld [vmem:[#allocation5 + $0x80] sm:$0xff]
    %v106 = vld [vmem:[#allocation5 + $0x88] sm:$0xff]
    %v107 = vld [vmem:[#allocation5 + $0x90] sm:$0xff]
    %v108 = vld [vmem:[#allocation5 + $0x98] sm:$0xff]
    %v109 = vld [vmem:[#allocation5 + $0xa0] sm:$0xff]
    %v110 = vld [vmem:[#allocation5 + $0xa8] sm:$0xff]
    %v111 = vld [vmem:[#allocation5 + $0xb0] sm:$0xff]
    %v112 = vld [vmem:[#allocation5 + $0xb8] sm:$0xff]
    %v113 = vld [vmem:[#allocation5 + $0xc0] sm:$0xff]
    %v114 = vld [vmem:[#allocation5 + $0xc8] sm:$0xff]
    %v115 = vld [vmem:[#allocation5 + $0xd0] sm:$0xff]
    %v116 = vld [vmem:[#allocation5 + $0xd8] sm:$0xff]
    %v117 = vld [vmem:[#allocation5 + $0xe0] sm:$0xff]
    %v118 = vld [vmem:[#allocation5 + $0xe8] sm:$0xff]
    %v119 = vld [vmem:[#allocation5 + $0xf0] sm:$0xff]
    %v120 = vld [vmem:[#allocation5 + $0xf8] sm:$0xff]
    %v121 = vld [vmem:[#allocation5 + $0x100] sm:$0xff]
    %v122 = vld [vmem:[#allocation5 + $0x108] sm:$0xff]
    %v123 = vld [vmem:[#allocation5 + $0x110] sm:$0xff]
    %v124 = vld [vmem:[#allocation5 + $0x118] sm:$0xff]
    %v125 = vld [vmem:[#allocation5 + $0x120] sm:$0xff]
    %v126 = vld [vmem:[#allocation5 + $0x128] sm:$0xff]
    %v127 = vld [vmem:[#allocation5 + $0x130] sm:$0xff]
    %v128 = vld [vmem:[#allocation5 + $0x138] sm:$0xff]
    %v129 = vld [vmem:[#allocation5 + $0x140] sm:$0xff]
    %v130 = vld [vmem:[#allocation5 + $0x148] sm:$0xff]
    %v131 = vld [vmem:[#allocation5 + $0x150] sm:$0xff]
    %v132 = vld [vmem:[#allocation5 + $0x158] sm:$0xff]
    %v133 = vld [vmem:[#allocation5 + $0x160] sm:$0xff]
    %v134 = vld [vmem:[#allocation5 + $0x168] sm:$0xff]
    %v135 = vld [vmem:[#allocation5 + $0x170] sm:$0xff]
    %v136 = vld [vmem:[#allocation5 + $0x178] sm:$0xff]
    %v137 = vld [vmem:[#allocation5 + $0x180] sm:$0xff]
    %v138 = vld [vmem:[#allocation5 + $0x188] sm:$0xff]
    %v139 = vld [vmem:[#allocation5 + $0x190] sm:$0xff]
    %v140 = vld [vmem:[#allocation5 + $0x198] sm:$0xff]
    %v141 = vld [vmem:[#allocation5 + $0x1a0] sm:$0xff]
    %v142 = vld [vmem:[#allocation5 + $0x1a8] sm:$0xff]
    %v143 = vld [vmem:[#allocation5 + $0x1b0] sm:$0xff]
    %v144 = vld [vmem:[#allocation5 + $0x1b8] sm:$0xff]
    %v145 = vld [vmem:[#allocation5 + $0x1c0] sm:$0xff]
    %v146 = vld [vmem:[#allocation5 + $0x1c8] sm:$0xff]
    %v147 = vld [vmem:[#allocation5 + $0x1d0] sm:$0xff]
    %v148 = vld [vmem:[#allocation5 + $0x1d8] sm:$0xff]
    %v149 = vld [vmem:[#allocation5 + $0x1e0] sm:$0xff]
    %v150 = vld [vmem:[#allocation5 + $0x1e8] sm:$0xff]
    %v151 = vld [vmem:[#allocation5 + $0x1f0] sm:$0xff]
    %v152 = vld [vmem:[#allocation5 + $0x1f8] sm:$0xff]
    %v153 = vld [vmem:[#allocation5 + $0x200] sm:$0xff]
    %v154 = vld [vmem:[#allocation5 + $0x208] sm:$0xff]
    %v155 = vld [vmem:[#allocation5 + $0x210] sm:$0xff]
    %v156 = vld [vmem:[#allocation5 + $0x218] sm:$0xff]
    %v157 = vld [vmem:[#allocation5 + $0x220] sm:$0xff]
    %v158 = vld [vmem:[#allocation5 + $0x228] sm:$0xff]
    %v159 = vld [vmem:[#allocation5 + $0x230] sm:$0xff]
    %v160 = vld [vmem:[#allocation5 + $0x238] sm:$0xff]
    %v161 = vld [vmem:[#allocation5 + $0x240] sm:$0xff]
    %v162 = vld [vmem:[#allocation5 + $0x248] sm:$0xff]
    %v163 = vld [vmem:[#allocation5 + $0x250] sm:$0xff]
    %v164 = vld [vmem:[#allocation5 + $0x258] sm:$0xff]
    %v165 = vld [vmem:[#allocation5 + $0x260] sm:$0xff]
    %v166 = vld [vmem:[#allocation5 + $0x268] sm:$0xff]
    %v167 = vld [vmem:[#allocation5 + $0x270] sm:$0xff]
    %v168 = vld [vmem:[#allocation5 + $0x278] sm:$0xff]
    %v169 = vld [vmem:[#allocation5 + $0x280] sm:$0xff]
    %v170 = vld [vmem:[#allocation5 + $0x288] sm:$0xff]
    %v171 = vld [vmem:[#allocation5 + $0x290] sm:$0xff]
    %v172 = vld [vmem:[#allocation5 + $0x298] sm:$0xff]
    %v173 = vld [vmem:[#allocation5 + $0x2a0] sm:$0xff]
    %v174 = vld [vmem:[#allocation5 + $0x2a8] sm:$0xff]
    %v175 = vld [vmem:[#allocation5 + $0x2b0] sm:$0xff]
    %v176 = vld [vmem:[#allocation5 + $0x2b8] sm:$0xff]
    %v177 = vld [vmem:[#allocation5 + $0x2c0] sm:$0xff]
    %v178 = vld [vmem:[#allocation5 + $0x2c8] sm:$0xff]
    %v179 = vld [vmem:[#allocation5 + $0x2d0] sm:$0xff]
    %v180 = vld [vmem:[#allocation5 + $0x2d8] sm:$0xff]
    %v181 = vld [vmem:[#allocation5 + $0x2e0] sm:$0xff]
    %v182 = vld [vmem:[#allocation5 + $0x2e8] sm:$0xff]
    %v183 = vld [vmem:[#allocation5 + $0x2f0] sm:$0xff]
    %v184 = vld [vmem:[#allocation5 + $0x2f8] sm:$0xff]
    %v185 = vld [vmem:[#allocation5 + $0x300] sm:$0xff]
    %v186 = vld [vmem:[#allocation5 + $0x308] sm:$0xff]
    %v187 = vld [vmem:[#allocation5 + $0x310] sm:$0xff]
    %v188 = vld [vmem:[#allocation5 + $0x318] sm:$0xff]
    %v189 = vld [vmem:[#allocation5 + $0x320] sm:$0xff]
    %v190 = vld [vmem:[#allocation5 + $0x328] sm:$0xff]
    %v191 = vld [vmem:[#allocation5 + $0x330] sm:$0xff]
    %v192 = vld [vmem:[#allocation5 + $0x338] sm:$0xff]
    %v193 = vld [vmem:[#allocation5 + $0x340] sm:$0xff]
    %v194 = vld [vmem:[#allocation5 + $0x348] sm:$0xff]
    %v195 = vld [vmem:[#allocation5 + $0x350] sm:$0xff]
    %v196 = vld [vmem:[#allocation5 + $0x358] sm:$0xff]
    %v197 = vld [vmem:[#allocation5 + $0x360] sm:$0xff]
    %v198 = vld [vmem:[#allocation5 + $0x368] sm:$0xff]
    %v199 = vld [vmem:[#allocation5 + $0x370] sm:$0xff]
    %v200 = vld [vmem:[#allocation5 + $0x378] sm:$0xff]
    %v201 = vld [vmem:[#allocation5 + $0x380] sm:$0xff]
    %v202 = vld [vmem:[#allocation5 + $0x388] sm:$0xff]
    %v203 = vld [vmem:[#allocation5 + $0x390] sm:$0xff]
    %v204 = vld [vmem:[#allocation5 + $0x398] sm:$0xff]
    %v205 = vld [vmem:[#allocation5 + $0x3a0] sm:$0xff]
    %v206 = vld [vmem:[#allocation5 + $0x3a8] sm:$0xff]
    %v207 = vld [vmem:[#allocation5 + $0x3b0] sm:$0xff]
    %v208 = vld [vmem:[#allocation5 + $0x3b8] sm:$0xff]
    %v209 = vld [vmem:[#allocation5 + $0x3c0] sm:$0xff]
    %v210 = vld [vmem:[#allocation5 + $0x3c8] sm:$0xff]
    %v211 = vld [vmem:[#allocation5 + $0x3d0] sm:$0xff]
    %v212 = vld [vmem:[#allocation5 + $0x3d8] sm:$0xff]
    %v213 = vld [vmem:[#allocation5 + $0x3e0] sm:$0xff]
    %v214 = vld [vmem:[#allocation5 + $0x3e8] sm:$0xff]
    %v215 = vld [vmem:[#allocation5 + $0x3f0] sm:$0xff]
    %v216 = vld [vmem:[#allocation5 + $0x3f8] sm:$0xff]
    %v217 = vld [vmem:[#allocation5 + $0x400] sm:$0xff]
    %v218 = vld [vmem:[#allocation5 + $0x408] sm:$0xff]
    %v219 = vld [vmem:[#allocation5 + $0x410] sm:$0xff]
    %v220 = vld [vmem:[#allocation5 + $0x418] sm:$0xff]
    %v221 = vld [vmem:[#allocation5 + $0x420] sm:$0xff]
    %v222 = vld [vmem:[#allocation5 + $0x428] sm:$0xff]
    %v223 = vld [vmem:[#allocation5 + $0x430] sm:$0xff]
    %v224 = vld [vmem:[#allocation5 + $0x438] sm:$0xff]
    %v225 = vld [vmem:[#allocation5 + $0x440] sm:$0xff]
    %v226 = vld [vmem:[#allocation5 + $0x448] sm:$0xff]
    %v227 = vld [vmem:[#allocation5 + $0x450] sm:$0xff]
    %v228 = vld [vmem:[#allocation5 + $0x458] sm:$0xff]
    %v229 = vld [vmem:[#allocation5 + $0x460] sm:$0xff]
    %v230 = vld [vmem:[#allocation5 + $0x468] sm:$0xff]
    %v231 = vld [vmem:[#allocation5 + $0x470] sm:$0xff]
    %v232 = vld [vmem:[#allocation5 + $0x478] sm:$0xff]
    %v233 = vld [vmem:[#allocation5 + $0x480] sm:$0xff]
    %v234 = vld [vmem:[#allocation5 + $0x488] sm:$0xff]
    %v235 = vld [vmem:[#allocation5 + $0x490] sm:$0xff]
    %v236 = vld [vmem:[#allocation5 + $0x498] sm:$0xff]
    %v237 = vld [vmem:[#allocation5 + $0x4a0] sm:$0xff]
    %v238 = vld [vmem:[#allocation5 + $0x4a8] sm:$0xff]
    %v239 = vld [vmem:[#allocation5 + $0x4b0] sm:$0xff]
    %v240 = vld [vmem:[#allocation5 + $0x4b8] sm:$0xff]
    %v241 = vld [vmem:[#allocation5 + $0x4c0] sm:$0xff]
    %v242 = vld [vmem:[#allocation5 + $0x4c8] sm:$0xff]
    %v243 = vld [vmem:[#allocation5 + $0x4d0] sm:$0xff]
    %v244 = vld [vmem:[#allocation5 + $0x4d8] sm:$0xff]
    %v245 = vld [vmem:[#allocation5 + $0x4e0] sm:$0xff]
    %v246 = vld [vmem:[#allocation5 + $0x4e8] sm:$0xff]
    %v247 = vld [vmem:[#allocation5 + $0x4f0] sm:$0xff]
    %v248 = vld [vmem:[#allocation5 + $0x4f8] sm:$0xff]
    %v249 = vld [vmem:[#allocation5 + $0x500] sm:$0xff]
    %v250 = vld [vmem:[#allocation5 + $0x508] sm:$0xff]
    %v251 = vld [vmem:[#allocation5 + $0x510] sm:$0xff]
    %v252 = vld [vmem:[#allocation5 + $0x518] sm:$0xff]
    %v253 = vld [vmem:[#allocation5 + $0x520] sm:$0xff]
    %v254 = vld [vmem:[#allocation5 + $0x528] sm:$0xff]
    %v255 = vld [vmem:[#allocation5 + $0x530] sm:$0xff]
    %v256 = vld [vmem:[#allocation5 + $0x538] sm:$0xff]
    %v257 = vld [vmem:[#allocation5 + $0x540] sm:$0xff]
    %v258 = vld [vmem:[#allocation5 + $0x548] sm:$0xff]
    %v259 = vld [vmem:[#allocation5 + $0x550] sm:$0xff]
    %v260 = vld [vmem:[#allocation5 + $0x558] sm:$0xff]
    %v261 = vld [vmem:[#allocation5 + $0x560] sm:$0xff]
    %v262 = vld [vmem:[#allocation5 + $0x568] sm:$0xff]
    %v263 = vld [vmem:[#allocation5 + $0x570] sm:$0xff]
    %v264 = vld [vmem:[#allocation5 + $0x578] sm:$0xff]
    %v265 = vld [vmem:[#allocation5 + $0x580] sm:$0xff]
    %v266 = vld [vmem:[#allocation5 + $0x588] sm:$0xff]
    %v267 = vld [vmem:[#allocation5 + $0x590] sm:$0xff]
    %v268 = vld [vmem:[#allocation5 + $0x598] sm:$0xff]
    %v269 = vld [vmem:[#allocation5 + $0x5a0] sm:$0xff]
    %v270 = vld [vmem:[#allocation5 + $0x5a8] sm:$0xff]
    %v271 = vld [vmem:[#allocation5 + $0x5b0] sm:$0xff]
    %v272 = vld [vmem:[#allocation5 + $0x5b8] sm:$0xff]
    %v273 = vld [vmem:[#allocation5 + $0x5c0] sm:$0xff]
    %v274 = vld [vmem:[#allocation5 + $0x5c8] sm:$0xff]
    %v275 = vld [vmem:[#allocation5 + $0x5d0] sm:$0xff]
    %v276 = vld [vmem:[#allocation5 + $0x5d8] sm:$0xff]
    %v277 = vld [vmem:[#allocation5 + $0x5e0] sm:$0xff]
    %v278 = vld [vmem:[#allocation5 + $0x5e8] sm:$0xff]
    %v279 = vld [vmem:[#allocation5 + $0x5f0] sm:$0xff]
    %v280 = vld [vmem:[#allocation5 + $0x5f8] sm:$0xff]
    %v281 = vld [vmem:[#allocation5 + $0x600] sm:$0xff]
    %v282 = vld [vmem:[#allocation5 + $0x608] sm:$0xff]
    %v283 = vld [vmem:[#allocation5 + $0x610] sm:$0xff]
    %v284 = vld [vmem:[#allocation5 + $0x618] sm:$0xff]
    %v285 = vld [vmem:[#allocation5 + $0x620] sm:$0xff]
    %v286 = vld [vmem:[#allocation5 + $0x628] sm:$0xff]
    %v287 = vld [vmem:[#allocation5 + $0x630] sm:$0xff]
    %v288 = vld [vmem:[#allocation5 + $0x638] sm:$0xff]
    %v289 = vld [vmem:[#allocation5 + $0x640] sm:$0xff]
    %v290 = vld [vmem:[#allocation5 + $0x648] sm:$0xff]
    %v291 = vld [vmem:[#allocation5 + $0x650] sm:$0xff]
    %v292 = vld [vmem:[#allocation5 + $0x658] sm:$0xff]
    %v293 = vld [vmem:[#allocation5 + $0x660] sm:$0xff]
    %v294 = vld [vmem:[#allocation5 + $0x668] sm:$0xff]
    %v295 = vld [vmem:[#allocation5 + $0x670] sm:$0xff]
    %v296 = vld [vmem:[#allocation5 + $0x678] sm:$0xff]
    %v297 = vld [vmem:[#allocation5 + $0x680] sm:$0xff]
    %v298 = vld [vmem:[#allocation5 + $0x688] sm:$0xff]
    %v299 = vld [vmem:[#allocation5 + $0x690] sm:$0xff]
    %v300 = vld [vmem:[#allocation5 + $0x698] sm:$0xff]
    %v301 = vld [vmem:[#allocation5 + $0x6a0] sm:$0xff]
    %v302 = vld [vmem:[#allocation5 + $0x6a8] sm:$0xff]
    %v303 = vld [vmem:[#allocation5 + $0x6b0] sm:$0xff]
    %v304 = vld [vmem:[#allocation5 + $0x6b8] sm:$0xff]
    %v305 = vld [vmem:[#allocation5 + $0x6c0] sm:$0xff]
    %v306 = vld [vmem:[#allocation5 + $0x6c8] sm:$0xff]
    %v307 = vld [vmem:[#allocation5 + $0x6d0] sm:$0xff]
    %v308 = vld [vmem:[#allocation5 + $0x6d8] sm:$0xff]
    %v309 = vld [vmem:[#allocation5 + $0x6e0] sm:$0xff]
    %v310 = vld [vmem:[#allocation5 + $0x6e8] sm:$0xff]
    %v311 = vld [vmem:[#allocation5 + $0x6f0] sm:$0xff]
    %v312 = vld [vmem:[#allocation5 + $0x6f8] sm:$0xff]
    %v313 = vld [vmem:[#allocation5 + $0x700] sm:$0xff]
    %v314 = vld [vmem:[#allocation5 + $0x708] sm:$0xff]
    %v315 = vld [vmem:[#allocation5 + $0x710] sm:$0xff]
    %v316 = vld [vmem:[#allocation5 + $0x718] sm:$0xff]
    %v317 = vld [vmem:[#allocation5 + $0x720] sm:$0xff]
    %v318 = vld [vmem:[#allocation5 + $0x728] sm:$0xff]
    %v319 = vld [vmem:[#allocation5 + $0x730] sm:$0xff]
    %v320 = vld [vmem:[#allocation5 + $0x738] sm:$0xff]
    %v321 = vld [vmem:[#allocation5 + $0x740] sm:$0xff]
    %v322 = vld [vmem:[#allocation5 + $0x748] sm:$0xff]
    %v323 = vld [vmem:[#allocation5 + $0x750] sm:$0xff]
    %v324 = vld [vmem:[#allocation5 + $0x758] sm:$0xff]
    %v325 = vld [vmem:[#allocation5 + $0x760] sm:$0xff]
    %v326 = vld [vmem:[#allocation5 + $0x768] sm:$0xff]
    %v327 = vld [vmem:[#allocation5 + $0x770] sm:$0xff]
    %v328 = vld [vmem:[#allocation5 + $0x778] sm:$0xff]
    %v329 = vld [vmem:[#allocation5 + $0x780] sm:$0xff]
    %v330 = vld [vmem:[#allocation5 + $0x788] sm:$0xff]
    %v331 = vld [vmem:[#allocation5 + $0x790] sm:$0xff]
    %v332 = vld [vmem:[#allocation5 + $0x798] sm:$0xff]
    %v333 = vld [vmem:[#allocation5 + $0x7a0] sm:$0xff]
    %v334 = vld [vmem:[#allocation5 + $0x7a8] sm:$0xff]
    %v335 = vld [vmem:[#allocation5 + $0x7b0] sm:$0xff]
    %v336 = vld [vmem:[#allocation5 + $0x7b8] sm:$0xff]
    %v337 = vld [vmem:[#allocation5 + $0x7c0] sm:$0xff]
    %v338 = vld [vmem:[#allocation5 + $0x7c8] sm:$0xff]
    %v339 = vld [vmem:[#allocation5 + $0x7d0] sm:$0xff]
    %v340 = vld [vmem:[#allocation5 + $0x7d8] sm:$0xff]
    %v341 = vld [vmem:[#allocation5 + $0x7e0] sm:$0xff]
    %v342 = vld [vmem:[#allocation5 + $0x7e8] sm:$0xff]
    %v343 = vld [vmem:[#allocation5 + $0x7f0] sm:$0xff]
    %v344 = vld [vmem:[#allocation5 + $0x7f8] sm:$0xff]
    %v345 = vld [vmem:[#allocation5 + $0x800] sm:$0xff]
    %v346 = vld [vmem:[#allocation5 + $0x808] sm:$0xff]
    %v347 = vld [vmem:[#allocation5 + $0x810] sm:$0xff]
    %v348 = vld [vmem:[#allocation5 + $0x818] sm:$0xff]
    %v349 = vld [vmem:[#allocation5 + $0x820] sm:$0xff]
    %v350 = vld [vmem:[#allocation5 + $0x828] sm:$0xff]
    %v351 = vld [vmem:[#allocation5 + $0x830] sm:$0xff]
    %v352 = vld [vmem:[#allocation5 + $0x838] sm:$0xff]
    %v353 = vld [vmem:[#allocation5 + $0x840] sm:$0xff]
    %v354 = vld [vmem:[#allocation5 + $0x848] sm:$0xff]
    %v355 = vld [vmem:[#allocation5 + $0x850] sm:$0xff]
    %v356 = vld [vmem:[#allocation5 + $0x858] sm:$0xff]
    %v357 = vld [vmem:[#allocation5 + $0x860] sm:$0xff]
    %v358 = vld [vmem:[#allocation5 + $0x868] sm:$0xff]
    %v359 = vld [vmem:[#allocation5 + $0x870] sm:$0xff]
    %v360 = vld [vmem:[#allocation5 + $0x878] sm:$0xff]
    %v361 = vld [vmem:[#allocation5 + $0x880] sm:$0xff]
    %v362 = vld [vmem:[#allocation5 + $0x888] sm:$0xff]
    %v363 = vld [vmem:[#allocation5 + $0x890] sm:$0xff]
    %v364 = vld [vmem:[#allocation5 + $0x898] sm:$0xff]
    %v365 = vld [vmem:[#allocation5 + $0x8a0] sm:$0xff]
    %v366 = vld [vmem:[#allocation5 + $0x8a8] sm:$0xff]
    %v367 = vld [vmem:[#allocation5 + $0x8b0] sm:$0xff]
    %v368 = vld [vmem:[#allocation5 + $0x8b8] sm:$0xff]
    %v369 = vld [vmem:[#allocation5 + $0x8c0] sm:$0xff]
    %v370 = vld [vmem:[#allocation5 + $0x8c8] sm:$0xff]
    %v371 = vld [vmem:[#allocation5 + $0x8d0] sm:$0xff]
    %v372 = vld [vmem:[#allocation5 + $0x8d8] sm:$0xff]
    %v373 = vld [vmem:[#allocation5 + $0x8e0] sm:$0xff]
    %v374 = vld [vmem:[#allocation5 + $0x8e8] sm:$0xff]
    %v375 = vld [vmem:[#allocation5 + $0x8f0] sm:$0xff]
    %v376 = vld [vmem:[#allocation5 + $0x8f8] sm:$0xff]
    %v377 = vld [vmem:[#allocation5 + $0x900] sm:$0xff]
    %v378 = vld [vmem:[#allocation5 + $0x908] sm:$0xff]
    %v379 = vld [vmem:[#allocation5 + $0x910] sm:$0xff]
    %v380 = vld [vmem:[#allocation5 + $0x918] sm:$0xff]
    %v381 = vld [vmem:[#allocation5 + $0x920] sm:$0xff]
    %v382 = vld [vmem:[#allocation5 + $0x928] sm:$0xff]
    %v383 = vld [vmem:[#allocation5 + $0x930] sm:$0xff]
    %v384 = vld [vmem:[#allocation5 + $0x938] sm:$0xff]
    %v385 = vld [vmem:[#allocation5 + $0x940] sm:$0xff]
    %v386 = vld [vmem:[#allocation5 + $0x948] sm:$0xff]
    %v387 = vld [vmem:[#allocation5 + $0x950] sm:$0xff]
    %v388 = vld [vmem:[#allocation5 + $0x958] sm:$0xff]
    %v389 = vld [vmem:[#allocation5 + $0x960] sm:$0xff]
    %v390 = vld [vmem:[#allocation5 + $0x968] sm:$0xff]
    %v391 = vld [vmem:[#allocation5 + $0x970] sm:$0xff]
    %v392 = vld [vmem:[#allocation5 + $0x978] sm:$0xff]
    %v393 = vld [vmem:[#allocation5 + $0x980] sm:$0xff]
    %v394 = vld [vmem:[#allocation5 + $0x988] sm:$0xff]
    %v395 = vld [vmem:[#allocation5 + $0x990] sm:$0xff]
    %v396 = vld [vmem:[#allocation5 + $0x998] sm:$0xff]
    %v397 = vld [vmem:[#allocation5 + $0x9a0] sm:$0xff]
    %v398 = vld [vmem:[#allocation5 + $0x9a8] sm:$0xff]
    %v399 = vld [vmem:[#allocation5 + $0x9b0] sm:$0xff]
    %v400 = vld [vmem:[#allocation5 + $0x9b8] sm:$0xff]
    %v401 = vld [vmem:[#allocation5 + $0x9c0] sm:$0xff]
    %v402 = vld [vmem:[#allocation5 + $0x9c8] sm:$0xff]
    %v403 = vld [vmem:[#allocation5 + $0x9d0] sm:$0xff]
    %v404 = vld [vmem:[#allocation5 + $0x9d8] sm:$0xff]
    %v405 = vld [vmem:[#allocation5 + $0x9e0] sm:$0xff]
    %v406 = vld [vmem:[#allocation5 + $0x9e8] sm:$0xff]
    %v407 = vld [vmem:[#allocation5 + $0x9f0] sm:$0xff]
    %v408 = vld [vmem:[#allocation5 + $0x9f8] sm:$0xff]
    %v409 = vld [vmem:[#allocation7] sm:$0xf]
    %v411 = vlaneseq
    %v412 = vshrl.u32 %v411, 7
    %v413 = vsub.s32 0, %v412
    %v414 = vrot.slane %v409, %v413
    %v415 = vlaneseq
    %v416 = vshrl.u32 %v415, 7
    %v417 = vsub.s32 1, %v416
    %v418 = vrot.slane %v409, %v417
    %v419 = vlaneseq
    %v420 = vshrl.u32 %v419, 7
    %v421 = vsub.s32 2, %v420
    %v422 = vrot.slane %v409, %v421
    %v423 = vlaneseq
    %v424 = vshrl.u32 %v423, 7
    %v425 = vsub.s32 3, %v424
    %v426 = vrot.slane %v409, %v425
    %v436 = vunpack.c.l.b16 %v84
    %v437 = vunpack.c.h.b16 %v84
    %v438 = vunpack.c.l.b16 %v85
    %v439 = vunpack.c.h.b16 %v85
    %v440 = vunpack.c.l.b16 %v86
    %v441 = vunpack.c.h.b16 %v86
    %v442 = vunpack.c.l.b16 %v87
    %v443 = vunpack.c.h.b16 %v87
    %v444 = vunpack.c.l.b16 %v88
    %v445 = vunpack.c.h.b16 %v88
    %v446 = vpack.c.b16 %v436, %v436
    %v447 = vpack.c.b16 %v437, %v437
    %v448 = vpack.c.b16 %v438, %v438
    %v449 = vpack.c.b16 %v439, %v439
    %v450 = vpack.c.b16 %v440, %v440
    %v451 = vpack.c.b16 %v441, %v441
    %v452 = vpack.c.b16 %v442, %v442
    %v453 = vpack.c.b16 %v443, %v443
    %v454 = vpack.c.b16 %v444, %v444
    %v455 = vpack.c.b16 %v445, %v445
    %v786 = vunpack.c.l.b16 %v89
    %v787 = vunpack.c.h.b16 %v89
    %v788 = vunpack.c.l.b16 %v90
    %v789 = vunpack.c.h.b16 %v90
    %v790 = vunpack.c.l.b16 %v91
    %v791 = vunpack.c.h.b16 %v91
    %v792 = vunpack.c.l.b16 %v92
    %v793 = vunpack.c.h.b16 %v92
    %v794 = vunpack.c.l.b16 %v93
    %v795 = vunpack.c.h.b16 %v93
    %v796 = vunpack.c.l.b16 %v94
    %v797 = vunpack.c.h.b16 %v94
    %v798 = vunpack.c.l.b16 %v95
    %v799 = vunpack.c.h.b16 %v95
    %v800 = vunpack.c.l.b16 %v96
    %v801 = vunpack.c.h.b16 %v96
    %v802 = vunpack.c.l.b16 %v97
    %v803 = vunpack.c.h.b16 %v97
    %v804 = vunpack.c.l.b16 %v98
    %v805 = vunpack.c.h.b16 %v98
    %v806 = vunpack.c.l.b16 %v99
    %v807 = vunpack.c.h.b16 %v99
    %v808 = vunpack.c.l.b16 %v100
    %v809 = vunpack.c.h.b16 %v100
    %v810 = vunpack.c.l.b16 %v101
    %v811 = vunpack.c.h.b16 %v101
    %v812 = vunpack.c.l.b16 %v102
    %v813 = vunpack.c.h.b16 %v102
    %v814 = vunpack.c.l.b16 %v103
    %v815 = vunpack.c.h.b16 %v103
    %v816 = vunpack.c.l.b16 %v104
    %v817 = vunpack.c.h.b16 %v104
    %v818 = vunpack.c.l.b16 %v105
    %v819 = vunpack.c.h.b16 %v105
    %v820 = vunpack.c.l.b16 %v106
    %v821 = vunpack.c.h.b16 %v106
    %v822 = vunpack.c.l.b16 %v107
    %v823 = vunpack.c.h.b16 %v107
    %v824 = vunpack.c.l.b16 %v108
    %v825 = vunpack.c.h.b16 %v108
    %v826 = vunpack.c.l.b16 %v109
    %v827 = vunpack.c.h.b16 %v109
    %v828 = vunpack.c.l.b16 %v110
    %v829 = vunpack.c.h.b16 %v110
    %v830 = vunpack.c.l.b16 %v111
    %v831 = vunpack.c.h.b16 %v111
    %v832 = vunpack.c.l.b16 %v112
    %v833 = vunpack.c.h.b16 %v112
    %v834 = vunpack.c.l.b16 %v113
    %v835 = vunpack.c.h.b16 %v113
    %v836 = vunpack.c.l.b16 %v114
    %v837 = vunpack.c.h.b16 %v114
    %v838 = vunpack.c.l.b16 %v115
    %v839 = vunpack.c.h.b16 %v115
    %v840 = vunpack.c.l.b16 %v116
    %v841 = vunpack.c.h.b16 %v116
    %v842 = vunpack.c.l.b16 %v117
    %v843 = vunpack.c.h.b16 %v117
    %v844 = vunpack.c.l.b16 %v118
    %v845 = vunpack.c.h.b16 %v118
    %v846 = vunpack.c.l.b16 %v119
    %v847 = vunpack.c.h.b16 %v119
    %v848 = vunpack.c.l.b16 %v120
    %v849 = vunpack.c.h.b16 %v120
    %v850 = vunpack.c.l.b16 %v121
    %v851 = vunpack.c.h.b16 %v121
    %v852 = vunpack.c.l.b16 %v122
    %v853 = vunpack.c.h.b16 %v122
    %v854 = vunpack.c.l.b16 %v123
    %v855 = vunpack.c.h.b16 %v123
    %v856 = vunpack.c.l.b16 %v124
    %v857 = vunpack.c.h.b16 %v124
    %v858 = vunpack.c.l.b16 %v125
    %v859 = vunpack.c.h.b16 %v125
    %v860 = vunpack.c.l.b16 %v126
    %v861 = vunpack.c.h.b16 %v126
    %v862 = vunpack.c.l.b16 %v127
    %v863 = vunpack.c.h.b16 %v127
    %v864 = vunpack.c.l.b16 %v128
    %v865 = vunpack.c.h.b16 %v128
    %v866 = vunpack.c.l.b16 %v129
    %v867 = vunpack.c.h.b16 %v129
    %v868 = vunpack.c.l.b16 %v130
    %v869 = vunpack.c.h.b16 %v130
    %v870 = vunpack.c.l.b16 %v131
    %v871 = vunpack.c.h.b16 %v131
    %v872 = vunpack.c.l.b16 %v132
    %v873 = vunpack.c.h.b16 %v132
    %v874 = vunpack.c.l.b16 %v133
    %v875 = vunpack.c.h.b16 %v133
    %v876 = vunpack.c.l.b16 %v134
    %v877 = vunpack.c.h.b16 %v134
    %v878 = vunpack.c.l.b16 %v135
    %v879 = vunpack.c.h.b16 %v135
    %v880 = vunpack.c.l.b16 %v136
    %v881 = vunpack.c.h.b16 %v136
    %v882 = vunpack.c.l.b16 %v137
    %v883 = vunpack.c.h.b16 %v137
    %v884 = vunpack.c.l.b16 %v138
    %v885 = vunpack.c.h.b16 %v138
    %v886 = vunpack.c.l.b16 %v139
    %v887 = vunpack.c.h.b16 %v139
    %v888 = vunpack.c.l.b16 %v140
    %v889 = vunpack.c.h.b16 %v140
    %v890 = vunpack.c.l.b16 %v141
    %v891 = vunpack.c.h.b16 %v141
    %v892 = vunpack.c.l.b16 %v142
    %v893 = vunpack.c.h.b16 %v142
    %v894 = vunpack.c.l.b16 %v143
    %v895 = vunpack.c.h.b16 %v143
    %v896 = vunpack.c.l.b16 %v144
    %v897 = vunpack.c.h.b16 %v144
    %v898 = vunpack.c.l.b16 %v145
    %v899 = vunpack.c.h.b16 %v145
    %v900 = vunpack.c.l.b16 %v146
    %v901 = vunpack.c.h.b16 %v146
    %v902 = vunpack.c.l.b16 %v147
    %v903 = vunpack.c.h.b16 %v147
    %v904 = vunpack.c.l.b16 %v148
    %v905 = vunpack.c.h.b16 %v148
    %v906 = vunpack.c.l.b16 %v149
    %v907 = vunpack.c.h.b16 %v149
    %v908 = vunpack.c.l.b16 %v150
    %v909 = vunpack.c.h.b16 %v150
    %v910 = vunpack.c.l.b16 %v151
    %v911 = vunpack.c.h.b16 %v151
    %v912 = vunpack.c.l.b16 %v152
    %v913 = vunpack.c.h.b16 %v152
    %v914 = vunpack.c.l.b16 %v153
    %v915 = vunpack.c.h.b16 %v153
    %v916 = vunpack.c.l.b16 %v154
    %v917 = vunpack.c.h.b16 %v154
    %v918 = vunpack.c.l.b16 %v155
    %v919 = vunpack.c.h.b16 %v155
    %v920 = vunpack.c.l.b16 %v156
    %v921 = vunpack.c.h.b16 %v156
    %v922 = vunpack.c.l.b16 %v157
    %v923 = vunpack.c.h.b16 %v157
    %v924 = vunpack.c.l.b16 %v158
    %v925 = vunpack.c.h.b16 %v158
    %v926 = vunpack.c.l.b16 %v159
    %v927 = vunpack.c.h.b16 %v159
    %v928 = vunpack.c.l.b16 %v160
    %v929 = vunpack.c.h.b16 %v160
    %v930 = vunpack.c.l.b16 %v161
    %v931 = vunpack.c.h.b16 %v161
    %v932 = vunpack.c.l.b16 %v162
    %v933 = vunpack.c.h.b16 %v162
    %v934 = vunpack.c.l.b16 %v163
    %v935 = vunpack.c.h.b16 %v163
    %v936 = vunpack.c.l.b16 %v164
    %v937 = vunpack.c.h.b16 %v164
    %v938 = vunpack.c.l.b16 %v165
    %v939 = vunpack.c.h.b16 %v165
    %v940 = vunpack.c.l.b16 %v166
    %v941 = vunpack.c.h.b16 %v166
    %v942 = vunpack.c.l.b16 %v167
    %v943 = vunpack.c.h.b16 %v167
    %v944 = vunpack.c.l.b16 %v168
    %v945 = vunpack.c.h.b16 %v168
    %v946 = vunpack.c.l.b16 %v169
    %v947 = vunpack.c.h.b16 %v169
    %v948 = vunpack.c.l.b16 %v170
    %v949 = vunpack.c.h.b16 %v170
    %v950 = vunpack.c.l.b16 %v171
    %v951 = vunpack.c.h.b16 %v171
    %v952 = vunpack.c.l.b16 %v172
    %v953 = vunpack.c.h.b16 %v172
    %v954 = vunpack.c.l.b16 %v173
    %v955 = vunpack.c.h.b16 %v173
    %v956 = vunpack.c.l.b16 %v174
    %v957 = vunpack.c.h.b16 %v174
    %v958 = vunpack.c.l.b16 %v175
    %v959 = vunpack.c.h.b16 %v175
    %v960 = vunpack.c.l.b16 %v176
    %v961 = vunpack.c.h.b16 %v176
    %v962 = vunpack.c.l.b16 %v177
    %v963 = vunpack.c.h.b16 %v177
    %v964 = vunpack.c.l.b16 %v178
    %v965 = vunpack.c.h.b16 %v178
    %v966 = vunpack.c.l.b16 %v179
    %v967 = vunpack.c.h.b16 %v179
    %v968 = vunpack.c.l.b16 %v180
    %v969 = vunpack.c.h.b16 %v180
    %v970 = vunpack.c.l.b16 %v181
    %v971 = vunpack.c.h.b16 %v181
    %v972 = vunpack.c.l.b16 %v182
    %v973 = vunpack.c.h.b16 %v182
    %v974 = vunpack.c.l.b16 %v183
    %v975 = vunpack.c.h.b16 %v183
    %v976 = vunpack.c.l.b16 %v184
    %v977 = vunpack.c.h.b16 %v184
    %v978 = vunpack.c.l.b16 %v185
    %v979 = vunpack.c.h.b16 %v185
    %v980 = vunpack.c.l.b16 %v186
    %v981 = vunpack.c.h.b16 %v186
    %v982 = vunpack.c.l.b16 %v187
    %v983 = vunpack.c.h.b16 %v187
    %v984 = vunpack.c.l.b16 %v188
    %v985 = vunpack.c.h.b16 %v188
    %v986 = vunpack.c.l.b16 %v189
    %v987 = vunpack.c.h.b16 %v189
    %v988 = vunpack.c.l.b16 %v190
    %v989 = vunpack.c.h.b16 %v190
    %v990 = vunpack.c.l.b16 %v191
    %v991 = vunpack.c.h.b16 %v191
    %v992 = vunpack.c.l.b16 %v192
    %v993 = vunpack.c.h.b16 %v192
    %v994 = vunpack.c.l.b16 %v193
    %v995 = vunpack.c.h.b16 %v193
    %v996 = vunpack.c.l.b16 %v194
    %v997 = vunpack.c.h.b16 %v194
    %v998 = vunpack.c.l.b16 %v195
    %v999 = vunpack.c.h.b16 %v195
    %v1000 = vunpack.c.l.b16 %v196
    %v1001 = vunpack.c.h.b16 %v196
    %v1002 = vunpack.c.l.b16 %v197
    %v1003 = vunpack.c.h.b16 %v197
    %v1004 = vunpack.c.l.b16 %v198
    %v1005 = vunpack.c.h.b16 %v198
    %v1006 = vunpack.c.l.b16 %v199
    %v1007 = vunpack.c.h.b16 %v199
    %v1008 = vunpack.c.l.b16 %v200
    %v1009 = vunpack.c.h.b16 %v200
    %v1010 = vunpack.c.l.b16 %v201
    %v1011 = vunpack.c.h.b16 %v201
    %v1012 = vunpack.c.l.b16 %v202
    %v1013 = vunpack.c.h.b16 %v202
    %v1014 = vunpack.c.l.b16 %v203
    %v1015 = vunpack.c.h.b16 %v203
    %v1016 = vunpack.c.l.b16 %v204
    %v1017 = vunpack.c.h.b16 %v204
    %v1018 = vunpack.c.l.b16 %v205
    %v1019 = vunpack.c.h.b16 %v205
    %v1020 = vunpack.c.l.b16 %v206
    %v1021 = vunpack.c.h.b16 %v206
    %v1022 = vunpack.c.l.b16 %v207
    %v1023 = vunpack.c.h.b16 %v207
    %v1024 = vunpack.c.l.b16 %v208
    %v1025 = vunpack.c.h.b16 %v208
    %v1026 = vunpack.c.l.b16 %v209
    %v1027 = vunpack.c.h.b16 %v209
    %v1028 = vunpack.c.l.b16 %v210
    %v1029 = vunpack.c.h.b16 %v210
    %v1030 = vunpack.c.l.b16 %v211
    %v1031 = vunpack.c.h.b16 %v211
    %v1032 = vunpack.c.l.b16 %v212
    %v1033 = vunpack.c.h.b16 %v212
    %v1034 = vunpack.c.l.b16 %v213
    %v1035 = vunpack.c.h.b16 %v213
    %v1036 = vunpack.c.l.b16 %v214
    %v1037 = vunpack.c.h.b16 %v214
    %v1038 = vunpack.c.l.b16 %v215
    %v1039 = vunpack.c.h.b16 %v215
    %v1040 = vunpack.c.l.b16 %v216
    %v1041 = vunpack.c.h.b16 %v216
    %v1042 = vunpack.c.l.b16 %v217
    %v1043 = vunpack.c.h.b16 %v217
    %v1044 = vunpack.c.l.b16 %v218
    %v1045 = vunpack.c.h.b16 %v218
    %v1046 = vunpack.c.l.b16 %v219
    %v1047 = vunpack.c.h.b16 %v219
    %v1048 = vunpack.c.l.b16 %v220
    %v1049 = vunpack.c.h.b16 %v220
    %v1050 = vunpack.c.l.b16 %v221
    %v1051 = vunpack.c.h.b16 %v221
    %v1052 = vunpack.c.l.b16 %v222
    %v1053 = vunpack.c.h.b16 %v222
    %v1054 = vunpack.c.l.b16 %v223
    %v1055 = vunpack.c.h.b16 %v223
    %v1056 = vunpack.c.l.b16 %v224
    %v1057 = vunpack.c.h.b16 %v224
    %v1058 = vunpack.c.l.b16 %v225
    %v1059 = vunpack.c.h.b16 %v225
    %v1060 = vunpack.c.l.b16 %v226
    %v1061 = vunpack.c.h.b16 %v226
    %v1062 = vunpack.c.l.b16 %v227
    %v1063 = vunpack.c.h.b16 %v227
    %v1064 = vunpack.c.l.b16 %v228
    %v1065 = vunpack.c.h.b16 %v228
    %v1066 = vunpack.c.l.b16 %v229
    %v1067 = vunpack.c.h.b16 %v229
    %v1068 = vunpack.c.l.b16 %v230
    %v1069 = vunpack.c.h.b16 %v230
    %v1070 = vunpack.c.l.b16 %v231
    %v1071 = vunpack.c.h.b16 %v231
    %v1072 = vunpack.c.l.b16 %v232
    %v1073 = vunpack.c.h.b16 %v232
    %v1074 = vunpack.c.l.b16 %v233
    %v1075 = vunpack.c.h.b16 %v233
    %v1076 = vunpack.c.l.b16 %v234
    %v1077 = vunpack.c.h.b16 %v234
    %v1078 = vunpack.c.l.b16 %v235
    %v1079 = vunpack.c.h.b16 %v235
    %v1080 = vunpack.c.l.b16 %v236
    %v1081 = vunpack.c.h.b16 %v236
    %v1082 = vunpack.c.l.b16 %v237
    %v1083 = vunpack.c.h.b16 %v237
    %v1084 = vunpack.c.l.b16 %v238
    %v1085 = vunpack.c.h.b16 %v238
    %v1086 = vunpack.c.l.b16 %v239
    %v1087 = vunpack.c.h.b16 %v239
    %v1088 = vunpack.c.l.b16 %v240
    %v1089 = vunpack.c.h.b16 %v240
    %v1090 = vunpack.c.l.b16 %v241
    %v1091 = vunpack.c.h.b16 %v241
    %v1092 = vunpack.c.l.b16 %v242
    %v1093 = vunpack.c.h.b16 %v242
    %v1094 = vunpack.c.l.b16 %v243
    %v1095 = vunpack.c.h.b16 %v243
    %v1096 = vunpack.c.l.b16 %v244
    %v1097 = vunpack.c.h.b16 %v244
    %v1098 = vunpack.c.l.b16 %v245
    %v1099 = vunpack.c.h.b16 %v245
    %v1100 = vunpack.c.l.b16 %v246
    %v1101 = vunpack.c.h.b16 %v246
    %v1102 = vunpack.c.l.b16 %v247
    %v1103 = vunpack.c.h.b16 %v247
    %v1104 = vunpack.c.l.b16 %v248
    %v1105 = vunpack.c.h.b16 %v248
    %v1106 = vunpack.c.l.b16 %v249
    %v1107 = vunpack.c.h.b16 %v249
    %v1108 = vunpack.c.l.b16 %v250
    %v1109 = vunpack.c.h.b16 %v250
    %v1110 = vunpack.c.l.b16 %v251
    %v1111 = vunpack.c.h.b16 %v251
    %v1112 = vunpack.c.l.b16 %v252
    %v1113 = vunpack.c.h.b16 %v252
    %v1114 = vunpack.c.l.b16 %v253
    %v1115 = vunpack.c.h.b16 %v253
    %v1116 = vunpack.c.l.b16 %v254
    %v1117 = vunpack.c.h.b16 %v254
    %v1118 = vunpack.c.l.b16 %v255
    %v1119 = vunpack.c.h.b16 %v255
    %v1120 = vunpack.c.l.b16 %v256
    %v1121 = vunpack.c.h.b16 %v256
    %v1122 = vunpack.c.l.b16 %v257
    %v1123 = vunpack.c.h.b16 %v257
    %v1124 = vunpack.c.l.b16 %v258
    %v1125 = vunpack.c.h.b16 %v258
    %v1126 = vunpack.c.l.b16 %v259
    %v1127 = vunpack.c.h.b16 %v259
    %v1128 = vunpack.c.l.b16 %v260
    %v1129 = vunpack.c.h.b16 %v260
    %v1130 = vunpack.c.l.b16 %v261
    %v1131 = vunpack.c.h.b16 %v261
    %v1132 = vunpack.c.l.b16 %v262
    %v1133 = vunpack.c.h.b16 %v262
    %v1134 = vunpack.c.l.b16 %v263
    %v1135 = vunpack.c.h.b16 %v263
    %v1136 = vunpack.c.l.b16 %v264
    %v1137 = vunpack.c.h.b16 %v264
    %v1138 = vunpack.c.l.b16 %v265
    %v1139 = vunpack.c.h.b16 %v265
    %v1140 = vunpack.c.l.b16 %v266
    %v1141 = vunpack.c.h.b16 %v266
    %v1142 = vunpack.c.l.b16 %v267
    %v1143 = vunpack.c.h.b16 %v267
    %v1144 = vunpack.c.l.b16 %v268
    %v1145 = vunpack.c.h.b16 %v268
    %v1146 = vunpack.c.l.b16 %v269
    %v1147 = vunpack.c.h.b16 %v269
    %v1148 = vunpack.c.l.b16 %v270
    %v1149 = vunpack.c.h.b16 %v270
    %v1150 = vunpack.c.l.b16 %v271
    %v1151 = vunpack.c.h.b16 %v271
    %v1152 = vunpack.c.l.b16 %v272
    %v1153 = vunpack.c.h.b16 %v272
    %v1154 = vunpack.c.l.b16 %v273
    %v1155 = vunpack.c.h.b16 %v273
    %v1156 = vunpack.c.l.b16 %v274
    %v1157 = vunpack.c.h.b16 %v274
    %v1158 = vunpack.c.l.b16 %v275
    %v1159 = vunpack.c.h.b16 %v275
    %v1160 = vunpack.c.l.b16 %v276
    %v1161 = vunpack.c.h.b16 %v276
    %v1162 = vunpack.c.l.b16 %v277
    %v1163 = vunpack.c.h.b16 %v277
    %v1164 = vunpack.c.l.b16 %v278
    %v1165 = vunpack.c.h.b16 %v278
    %v1166 = vunpack.c.l.b16 %v279
    %v1167 = vunpack.c.h.b16 %v279
    %v1168 = vunpack.c.l.b16 %v280
    %v1169 = vunpack.c.h.b16 %v280
    %v1170 = vunpack.c.l.b16 %v281
    %v1171 = vunpack.c.h.b16 %v281
    %v1172 = vunpack.c.l.b16 %v282
    %v1173 = vunpack.c.h.b16 %v282
    %v1174 = vunpack.c.l.b16 %v283
    %v1175 = vunpack.c.h.b16 %v283
    %v1176 = vunpack.c.l.b16 %v284
    %v1177 = vunpack.c.h.b16 %v284
    %v1178 = vunpack.c.l.b16 %v285
    %v1179 = vunpack.c.h.b16 %v285
    %v1180 = vunpack.c.l.b16 %v286
    %v1181 = vunpack.c.h.b16 %v286
    %v1182 = vunpack.c.l.b16 %v287
    %v1183 = vunpack.c.h.b16 %v287
    %v1184 = vunpack.c.l.b16 %v288
    %v1185 = vunpack.c.h.b16 %v288
    %v1186 = vunpack.c.l.b16 %v289
    %v1187 = vunpack.c.h.b16 %v289
    %v1188 = vunpack.c.l.b16 %v290
    %v1189 = vunpack.c.h.b16 %v290
    %v1190 = vunpack.c.l.b16 %v291
    %v1191 = vunpack.c.h.b16 %v291
    %v1192 = vunpack.c.l.b16 %v292
    %v1193 = vunpack.c.h.b16 %v292
    %v1194 = vunpack.c.l.b16 %v293
    %v1195 = vunpack.c.h.b16 %v293
    %v1196 = vunpack.c.l.b16 %v294
    %v1197 = vunpack.c.h.b16 %v294
    %v1198 = vunpack.c.l.b16 %v295
    %v1199 = vunpack.c.h.b16 %v295
    %v1200 = vunpack.c.l.b16 %v296
    %v1201 = vunpack.c.h.b16 %v296
    %v1202 = vunpack.c.l.b16 %v297
    %v1203 = vunpack.c.h.b16 %v297
    %v1204 = vunpack.c.l.b16 %v298
    %v1205 = vunpack.c.h.b16 %v298
    %v1206 = vunpack.c.l.b16 %v299
    %v1207 = vunpack.c.h.b16 %v299
    %v1208 = vunpack.c.l.b16 %v300
    %v1209 = vunpack.c.h.b16 %v300
    %v1210 = vunpack.c.l.b16 %v301
    %v1211 = vunpack.c.h.b16 %v301
    %v1212 = vunpack.c.l.b16 %v302
    %v1213 = vunpack.c.h.b16 %v302
    %v1214 = vunpack.c.l.b16 %v303
    %v1215 = vunpack.c.h.b16 %v303
    %v1216 = vunpack.c.l.b16 %v304
    %v1217 = vunpack.c.h.b16 %v304
    %v1218 = vunpack.c.l.b16 %v305
    %v1219 = vunpack.c.h.b16 %v305
    %v1220 = vunpack.c.l.b16 %v306
    %v1221 = vunpack.c.h.b16 %v306
    %v1222 = vunpack.c.l.b16 %v307
    %v1223 = vunpack.c.h.b16 %v307
    %v1224 = vunpack.c.l.b16 %v308
    %v1225 = vunpack.c.h.b16 %v308
    %v1226 = vunpack.c.l.b16 %v309
    %v1227 = vunpack.c.h.b16 %v309
    %v1228 = vunpack.c.l.b16 %v310
    %v1229 = vunpack.c.h.b16 %v310
    %v1230 = vunpack.c.l.b16 %v311
    %v1231 = vunpack.c.h.b16 %v311
    %v1232 = vunpack.c.l.b16 %v312
    %v1233 = vunpack.c.h.b16 %v312
    %v1234 = vunpack.c.l.b16 %v313
    %v1235 = vunpack.c.h.b16 %v313
    %v1236 = vunpack.c.l.b16 %v314
    %v1237 = vunpack.c.h.b16 %v314
    %v1238 = vunpack.c.l.b16 %v315
    %v1239 = vunpack.c.h.b16 %v315
    %v1240 = vunpack.c.l.b16 %v316
    %v1241 = vunpack.c.h.b16 %v316
    %v1242 = vunpack.c.l.b16 %v317
    %v1243 = vunpack.c.h.b16 %v317
    %v1244 = vunpack.c.l.b16 %v318
    %v1245 = vunpack.c.h.b16 %v318
    %v1246 = vunpack.c.l.b16 %v319
    %v1247 = vunpack.c.h.b16 %v319
    %v1248 = vunpack.c.l.b16 %v320
    %v1249 = vunpack.c.h.b16 %v320
    %v1250 = vunpack.c.l.b16 %v321
    %v1251 = vunpack.c.h.b16 %v321
    %v1252 = vunpack.c.l.b16 %v322
    %v1253 = vunpack.c.h.b16 %v322
    %v1254 = vunpack.c.l.b16 %v323
    %v1255 = vunpack.c.h.b16 %v323
    %v1256 = vunpack.c.l.b16 %v324
    %v1257 = vunpack.c.h.b16 %v324
    %v1258 = vunpack.c.l.b16 %v325
    %v1259 = vunpack.c.h.b16 %v325
    %v1260 = vunpack.c.l.b16 %v326
    %v1261 = vunpack.c.h.b16 %v326
    %v1262 = vunpack.c.l.b16 %v327
    %v1263 = vunpack.c.h.b16 %v327
    %v1264 = vunpack.c.l.b16 %v328
    %v1265 = vunpack.c.h.b16 %v328
    %v1266 = vunpack.c.l.b16 %v329
    %v1267 = vunpack.c.h.b16 %v329
    %v1268 = vunpack.c.l.b16 %v330
    %v1269 = vunpack.c.h.b16 %v330
    %v1270 = vunpack.c.l.b16 %v331
    %v1271 = vunpack.c.h.b16 %v331
    %v1272 = vunpack.c.l.b16 %v332
    %v1273 = vunpack.c.h.b16 %v332
    %v1274 = vunpack.c.l.b16 %v333
    %v1275 = vunpack.c.h.b16 %v333
    %v1276 = vunpack.c.l.b16 %v334
    %v1277 = vunpack.c.h.b16 %v334
    %v1278 = vunpack.c.l.b16 %v335
    %v1279 = vunpack.c.h.b16 %v335
    %v1280 = vunpack.c.l.b16 %v336
    %v1281 = vunpack.c.h.b16 %v336
    %v1282 = vunpack.c.l.b16 %v337
    %v1283 = vunpack.c.h.b16 %v337
    %v1284 = vunpack.c.l.b16 %v338
    %v1285 = vunpack.c.h.b16 %v338
    %v1286 = vunpack.c.l.b16 %v339
    %v1287 = vunpack.c.h.b16 %v339
    %v1288 = vunpack.c.l.b16 %v340
    %v1289 = vunpack.c.h.b16 %v340
    %v1290 = vunpack.c.l.b16 %v341
    %v1291 = vunpack.c.h.b16 %v341
    %v1292 = vunpack.c.l.b16 %v342
    %v1293 = vunpack.c.h.b16 %v342
    %v1294 = vunpack.c.l.b16 %v343
    %v1295 = vunpack.c.h.b16 %v343
    %v1296 = vunpack.c.l.b16 %v344
    %v1297 = vunpack.c.h.b16 %v344
    %v1298 = vunpack.c.l.b16 %v345
    %v1299 = vunpack.c.h.b16 %v345
    %v1300 = vunpack.c.l.b16 %v346
    %v1301 = vunpack.c.h.b16 %v346
    %v1302 = vunpack.c.l.b16 %v347
    %v1303 = vunpack.c.h.b16 %v347
    %v1304 = vunpack.c.l.b16 %v348
    %v1305 = vunpack.c.h.b16 %v348
    %v1306 = vunpack.c.l.b16 %v349
    %v1307 = vunpack.c.h.b16 %v349
    %v1308 = vunpack.c.l.b16 %v350
    %v1309 = vunpack.c.h.b16 %v350
    %v1310 = vunpack.c.l.b16 %v351
    %v1311 = vunpack.c.h.b16 %v351
    %v1312 = vunpack.c.l.b16 %v352
    %v1313 = vunpack.c.h.b16 %v352
    %v1314 = vunpack.c.l.b16 %v353
    %v1315 = vunpack.c.h.b16 %v353
    %v1316 = vunpack.c.l.b16 %v354
    %v1317 = vunpack.c.h.b16 %v354
    %v1318 = vunpack.c.l.b16 %v355
    %v1319 = vunpack.c.h.b16 %v355
    %v1320 = vunpack.c.l.b16 %v356
    %v1321 = vunpack.c.h.b16 %v356
    %v1322 = vunpack.c.l.b16 %v357
    %v1323 = vunpack.c.h.b16 %v357
    %v1324 = vunpack.c.l.b16 %v358
    %v1325 = vunpack.c.h.b16 %v358
    %v1326 = vunpack.c.l.b16 %v359
    %v1327 = vunpack.c.h.b16 %v359
    %v1328 = vunpack.c.l.b16 %v360
    %v1329 = vunpack.c.h.b16 %v360
    %v1330 = vunpack.c.l.b16 %v361
    %v1331 = vunpack.c.h.b16 %v361
    %v1332 = vunpack.c.l.b16 %v362
    %v1333 = vunpack.c.h.b16 %v362
    %v1334 = vunpack.c.l.b16 %v363
    %v1335 = vunpack.c.h.b16 %v363
    %v1336 = vunpack.c.l.b16 %v364
    %v1337 = vunpack.c.h.b16 %v364
    %v1338 = vunpack.c.l.b16 %v365
    %v1339 = vunpack.c.h.b16 %v365
    %v1340 = vunpack.c.l.b16 %v366
    %v1341 = vunpack.c.h.b16 %v366
    %v1342 = vunpack.c.l.b16 %v367
    %v1343 = vunpack.c.h.b16 %v367
    %v1344 = vunpack.c.l.b16 %v368
    %v1345 = vunpack.c.h.b16 %v368
    %v1346 = vunpack.c.l.b16 %v369
    %v1347 = vunpack.c.h.b16 %v369
    %v1348 = vunpack.c.l.b16 %v370
    %v1349 = vunpack.c.h.b16 %v370
    %v1350 = vunpack.c.l.b16 %v371
    %v1351 = vunpack.c.h.b16 %v371
    %v1352 = vunpack.c.l.b16 %v372
    %v1353 = vunpack.c.h.b16 %v372
    %v1354 = vunpack.c.l.b16 %v373
    %v1355 = vunpack.c.h.b16 %v373
    %v1356 = vunpack.c.l.b16 %v374
    %v1357 = vunpack.c.h.b16 %v374
    %v1358 = vunpack.c.l.b16 %v375
    %v1359 = vunpack.c.h.b16 %v375
    %v1360 = vunpack.c.l.b16 %v376
    %v1361 = vunpack.c.h.b16 %v376
    %v1362 = vunpack.c.l.b16 %v377
    %v1363 = vunpack.c.h.b16 %v377
    %v1364 = vunpack.c.l.b16 %v378
    %v1365 = vunpack.c.h.b16 %v378
    %v1366 = vunpack.c.l.b16 %v379
    %v1367 = vunpack.c.h.b16 %v379
    %v1368 = vunpack.c.l.b16 %v380
    %v1369 = vunpack.c.h.b16 %v380
    %v1370 = vunpack.c.l.b16 %v381
    %v1371 = vunpack.c.h.b16 %v381
    %v1372 = vunpack.c.l.b16 %v382
    %v1373 = vunpack.c.h.b16 %v382
    %v1374 = vunpack.c.l.b16 %v383
    %v1375 = vunpack.c.h.b16 %v383
    %v1376 = vunpack.c.l.b16 %v384
    %v1377 = vunpack.c.h.b16 %v384
    %v1378 = vunpack.c.l.b16 %v385
    %v1379 = vunpack.c.h.b16 %v385
    %v1380 = vunpack.c.l.b16 %v386
    %v1381 = vunpack.c.h.b16 %v386
    %v1382 = vunpack.c.l.b16 %v387
    %v1383 = vunpack.c.h.b16 %v387
    %v1384 = vunpack.c.l.b16 %v388
    %v1385 = vunpack.c.h.b16 %v388
    %v1386 = vunpack.c.l.b16 %v389
    %v1387 = vunpack.c.h.b16 %v389
    %v1388 = vunpack.c.l.b16 %v390
    %v1389 = vunpack.c.h.b16 %v390
    %v1390 = vunpack.c.l.b16 %v391
    %v1391 = vunpack.c.h.b16 %v391
    %v1392 = vunpack.c.l.b16 %v392
    %v1393 = vunpack.c.h.b16 %v392
    %v1394 = vunpack.c.l.b16 %v393
    %v1395 = vunpack.c.h.b16 %v393
    %v1396 = vunpack.c.l.b16 %v394
    %v1397 = vunpack.c.h.b16 %v394
    %v1398 = vunpack.c.l.b16 %v395
    %v1399 = vunpack.c.h.b16 %v395
    %v1400 = vunpack.c.l.b16 %v396
    %v1401 = vunpack.c.h.b16 %v396
    %v1402 = vunpack.c.l.b16 %v397
    %v1403 = vunpack.c.h.b16 %v397
    %v1404 = vunpack.c.l.b16 %v398
    %v1405 = vunpack.c.h.b16 %v398
    %v1406 = vunpack.c.l.b16 %v399
    %v1407 = vunpack.c.h.b16 %v399
    %v1408 = vunpack.c.l.b16 %v400
    %v1409 = vunpack.c.h.b16 %v400
    %v1410 = vunpack.c.l.b16 %v401
    %v1411 = vunpack.c.h.b16 %v401
    %v1412 = vunpack.c.l.b16 %v402
    %v1413 = vunpack.c.h.b16 %v402
    %v1414 = vunpack.c.l.b16 %v403
    %v1415 = vunpack.c.h.b16 %v403
    %v1416 = vunpack.c.l.b16 %v404
    %v1417 = vunpack.c.h.b16 %v404
    %v1418 = vunpack.c.l.b16 %v405
    %v1419 = vunpack.c.h.b16 %v405
    %v1420 = vunpack.c.l.b16 %v406
    %v1421 = vunpack.c.h.b16 %v406
    %v1422 = vunpack.c.l.b16 %v407
    %v1423 = vunpack.c.h.b16 %v407
    %v1424 = vunpack.c.l.b16 %v408
    %v1425 = vunpack.c.h.b16 %v408
    %v1426 = vpack.c.b16 %v790, %v786
    %v1427 = vpack.c.b16 %v791, %v787
    %v1428 = vpack.c.b16 %v792, %v788
    %v1429 = vpack.c.b16 %v793, %v789
    %v1430 = vpack.c.b16 %v798, %v794
    %v1431 = vpack.c.b16 %v799, %v795
    %v1432 = vpack.c.b16 %v800, %v796
    %v1433 = vpack.c.b16 %v801, %v797
    %v1434 = vpack.c.b16 %v806, %v802
    %v1435 = vpack.c.b16 %v807, %v803
    %v1436 = vpack.c.b16 %v808, %v804
    %v1437 = vpack.c.b16 %v809, %v805
    %v1438 = vpack.c.b16 %v814, %v810
    %v1439 = vpack.c.b16 %v815, %v811
    %v1440 = vpack.c.b16 %v816, %v812
    %v1441 = vpack.c.b16 %v817, %v813
    %v1442 = vpack.c.b16 %v822, %v818
    %v1443 = vpack.c.b16 %v823, %v819
    %v1444 = vpack.c.b16 %v824, %v820
    %v1445 = vpack.c.b16 %v825, %v821
    %v1446 = vpack.c.b16 %v830, %v826
    %v1447 = vpack.c.b16 %v831, %v827
    %v1448 = vpack.c.b16 %v832, %v828
    %v1449 = vpack.c.b16 %v833, %v829
    %v1450 = vpack.c.b16 %v838, %v834
    %v1451 = vpack.c.b16 %v839, %v835
    %v1452 = vpack.c.b16 %v840, %v836
    %v1453 = vpack.c.b16 %v841, %v837
    %v1454 = vpack.c.b16 %v846, %v842
    %v1455 = vpack.c.b16 %v847, %v843
    %v1456 = vpack.c.b16 %v848, %v844
    %v1457 = vpack.c.b16 %v849, %v845
    %v1458 = vpack.c.b16 %v854, %v850
    %v1459 = vpack.c.b16 %v855, %v851
    %v1460 = vpack.c.b16 %v856, %v852
    %v1461 = vpack.c.b16 %v857, %v853
    %v1462 = vpack.c.b16 %v862, %v858
    %v1463 = vpack.c.b16 %v863, %v859
    %v1464 = vpack.c.b16 %v864, %v860
    %v1465 = vpack.c.b16 %v865, %v861
    %v1466 = vpack.c.b16 %v870, %v866
    %v1467 = vpack.c.b16 %v871, %v867
    %v1468 = vpack.c.b16 %v872, %v868
    %v1469 = vpack.c.b16 %v873, %v869
    %v1470 = vpack.c.b16 %v878, %v874
    %v1471 = vpack.c.b16 %v879, %v875
    %v1472 = vpack.c.b16 %v880, %v876
    %v1473 = vpack.c.b16 %v881, %v877
    %v1474 = vpack.c.b16 %v886, %v882
    %v1475 = vpack.c.b16 %v887, %v883
    %v1476 = vpack.c.b16 %v888, %v884
    %v1477 = vpack.c.b16 %v889, %v885
    %v1478 = vpack.c.b16 %v894, %v890
    %v1479 = vpack.c.b16 %v895, %v891
    %v1480 = vpack.c.b16 %v896, %v892
    %v1481 = vpack.c.b16 %v897, %v893
    %v1482 = vpack.c.b16 %v902, %v898
    %v1483 = vpack.c.b16 %v903, %v899
    %v1484 = vpack.c.b16 %v904, %v900
    %v1485 = vpack.c.b16 %v905, %v901
    %v1486 = vpack.c.b16 %v910, %v906
    %v1487 = vpack.c.b16 %v911, %v907
    %v1488 = vpack.c.b16 %v912, %v908
    %v1489 = vpack.c.b16 %v913, %v909
    %v1490 = vpack.c.b16 %v918, %v914
    %v1491 = vpack.c.b16 %v919, %v915
    %v1492 = vpack.c.b16 %v920, %v916
    %v1493 = vpack.c.b16 %v921, %v917
    %v1494 = vpack.c.b16 %v926, %v922
    %v1495 = vpack.c.b16 %v927, %v923
    %v1496 = vpack.c.b16 %v928, %v924
    %v1497 = vpack.c.b16 %v929, %v925
    %v1498 = vpack.c.b16 %v934, %v930
    %v1499 = vpack.c.b16 %v935, %v931
    %v1500 = vpack.c.b16 %v936, %v932
    %v1501 = vpack.c.b16 %v937, %v933
    %v1502 = vpack.c.b16 %v942, %v938
    %v1503 = vpack.c.b16 %v943, %v939
    %v1504 = vpack.c.b16 %v944, %v940
    %v1505 = vpack.c.b16 %v945, %v941
    %v1506 = vpack.c.b16 %v950, %v946
    %v1507 = vpack.c.b16 %v951, %v947
    %v1508 = vpack.c.b16 %v952, %v948
    %v1509 = vpack.c.b16 %v953, %v949
    %v1510 = vpack.c.b16 %v958, %v954
    %v1511 = vpack.c.b16 %v959, %v955
    %v1512 = vpack.c.b16 %v960, %v956
    %v1513 = vpack.c.b16 %v961, %v957
    %v1514 = vpack.c.b16 %v966, %v962
    %v1515 = vpack.c.b16 %v967, %v963
    %v1516 = vpack.c.b16 %v968, %v964
    %v1517 = vpack.c.b16 %v969, %v965
    %v1518 = vpack.c.b16 %v974, %v970
    %v1519 = vpack.c.b16 %v975, %v971
    %v1520 = vpack.c.b16 %v976, %v972
    %v1521 = vpack.c.b16 %v977, %v973
    %v1522 = vpack.c.b16 %v982, %v978
    %v1523 = vpack.c.b16 %v983, %v979
    %v1524 = vpack.c.b16 %v984, %v980
    %v1525 = vpack.c.b16 %v985, %v981
    %v1526 = vpack.c.b16 %v990, %v986
    %v1527 = vpack.c.b16 %v991, %v987
    %v1528 = vpack.c.b16 %v992, %v988
    %v1529 = vpack.c.b16 %v993, %v989
    %v1530 = vpack.c.b16 %v998, %v994
    %v1531 = vpack.c.b16 %v999, %v995
    %v1532 = vpack.c.b16 %v1000, %v996
    %v1533 = vpack.c.b16 %v1001, %v997
    %v1534 = vpack.c.b16 %v1006, %v1002
    %v1535 = vpack.c.b16 %v1007, %v1003
    %v1536 = vpack.c.b16 %v1008, %v1004
    %v1537 = vpack.c.b16 %v1009, %v1005
    %v1538 = vpack.c.b16 %v1014, %v1010
    %v1539 = vpack.c.b16 %v1015, %v1011
    %v1540 = vpack.c.b16 %v1016, %v1012
    %v1541 = vpack.c.b16 %v1017, %v1013
    %v1542 = vpack.c.b16 %v1022, %v1018
    %v1543 = vpack.c.b16 %v1023, %v1019
    %v1544 = vpack.c.b16 %v1024, %v1020
    %v1545 = vpack.c.b16 %v1025, %v1021
    %v1546 = vpack.c.b16 %v1030, %v1026
    %v1547 = vpack.c.b16 %v1031, %v1027
    %v1548 = vpack.c.b16 %v1032, %v1028
    %v1549 = vpack.c.b16 %v1033, %v1029
    %v1550 = vpack.c.b16 %v1038, %v1034
    %v1551 = vpack.c.b16 %v1039, %v1035
    %v1552 = vpack.c.b16 %v1040, %v1036
    %v1553 = vpack.c.b16 %v1041, %v1037
    %v1554 = vpack.c.b16 %v1046, %v1042
    %v1555 = vpack.c.b16 %v1047, %v1043
    %v1556 = vpack.c.b16 %v1048, %v1044
    %v1557 = vpack.c.b16 %v1049, %v1045
    %v1558 = vpack.c.b16 %v1054, %v1050
    %v1559 = vpack.c.b16 %v1055, %v1051
    %v1560 = vpack.c.b16 %v1056, %v1052
    %v1561 = vpack.c.b16 %v1057, %v1053
    %v1562 = vpack.c.b16 %v1062, %v1058
    %v1563 = vpack.c.b16 %v1063, %v1059
    %v1564 = vpack.c.b16 %v1064, %v1060
    %v1565 = vpack.c.b16 %v1065, %v1061
    %v1566 = vpack.c.b16 %v1070, %v1066
    %v1567 = vpack.c.b16 %v1071, %v1067
    %v1568 = vpack.c.b16 %v1072, %v1068
    %v1569 = vpack.c.b16 %v1073, %v1069
    %v1570 = vpack.c.b16 %v1078, %v1074
    %v1571 = vpack.c.b16 %v1079, %v1075
    %v1572 = vpack.c.b16 %v1080, %v1076
    %v1573 = vpack.c.b16 %v1081, %v1077
    %v1574 = vpack.c.b16 %v1086, %v1082
    %v1575 = vpack.c.b16 %v1087, %v1083
    %v1576 = vpack.c.b16 %v1088, %v1084
    %v1577 = vpack.c.b16 %v1089, %v1085
    %v1578 = vpack.c.b16 %v1094, %v1090
    %v1579 = vpack.c.b16 %v1095, %v1091
    %v1580 = vpack.c.b16 %v1096, %v1092
    %v1581 = vpack.c.b16 %v1097, %v1093
    %v1582 = vpack.c.b16 %v1102, %v1098
    %v1583 = vpack.c.b16 %v1103, %v1099
    %v1584 = vpack.c.b16 %v1104, %v1100
    %v1585 = vpack.c.b16 %v1105, %v1101
    %v1586 = vpack.c.b16 %v1110, %v1106
    %v1587 = vpack.c.b16 %v1111, %v1107
    %v1588 = vpack.c.b16 %v1112, %v1108
    %v1589 = vpack.c.b16 %v1113, %v1109
    %v1590 = vpack.c.b16 %v1118, %v1114
    %v1591 = vpack.c.b16 %v1119, %v1115
    %v1592 = vpack.c.b16 %v1120, %v1116
    %v1593 = vpack.c.b16 %v1121, %v1117
    %v1594 = vpack.c.b16 %v1126, %v1122
    %v1595 = vpack.c.b16 %v1127, %v1123
    %v1596 = vpack.c.b16 %v1128, %v1124
    %v1597 = vpack.c.b16 %v1129, %v1125
    %v1598 = vpack.c.b16 %v1134, %v1130
    %v1599 = vpack.c.b16 %v1135, %v1131
    %v1600 = vpack.c.b16 %v1136, %v1132
    %v1601 = vpack.c.b16 %v1137, %v1133
    %v1602 = vpack.c.b16 %v1142, %v1138
    %v1603 = vpack.c.b16 %v1143, %v1139
    %v1604 = vpack.c.b16 %v1144, %v1140
    %v1605 = vpack.c.b16 %v1145, %v1141
    %v1606 = vpack.c.b16 %v1150, %v1146
    %v1607 = vpack.c.b16 %v1151, %v1147
    %v1608 = vpack.c.b16 %v1152, %v1148
    %v1609 = vpack.c.b16 %v1153, %v1149
    %v1610 = vpack.c.b16 %v1158, %v1154
    %v1611 = vpack.c.b16 %v1159, %v1155
    %v1612 = vpack.c.b16 %v1160, %v1156
    %v1613 = vpack.c.b16 %v1161, %v1157
    %v1614 = vpack.c.b16 %v1166, %v1162
    %v1615 = vpack.c.b16 %v1167, %v1163
    %v1616 = vpack.c.b16 %v1168, %v1164
    %v1617 = vpack.c.b16 %v1169, %v1165
    %v1618 = vpack.c.b16 %v1174, %v1170
    %v1619 = vpack.c.b16 %v1175, %v1171
    %v1620 = vpack.c.b16 %v1176, %v1172
    %v1621 = vpack.c.b16 %v1177, %v1173
    %v1622 = vpack.c.b16 %v1182, %v1178
    %v1623 = vpack.c.b16 %v1183, %v1179
    %v1624 = vpack.c.b16 %v1184, %v1180
    %v1625 = vpack.c.b16 %v1185, %v1181
    %v1626 = vpack.c.b16 %v1190, %v1186
    %v1627 = vpack.c.b16 %v1191, %v1187
    %v1628 = vpack.c.b16 %v1192, %v1188
    %v1629 = vpack.c.b16 %v1193, %v1189
    %v1630 = vpack.c.b16 %v1198, %v1194
    %v1631 = vpack.c.b16 %v1199, %v1195
    %v1632 = vpack.c.b16 %v1200, %v1196
    %v1633 = vpack.c.b16 %v1201, %v1197
    %v1634 = vpack.c.b16 %v1206, %v1202
    %v1635 = vpack.c.b16 %v1207, %v1203
    %v1636 = vpack.c.b16 %v1208, %v1204
    %v1637 = vpack.c.b16 %v1209, %v1205
    %v1638 = vpack.c.b16 %v1214, %v1210
    %v1639 = vpack.c.b16 %v1215, %v1211
    %v1640 = vpack.c.b16 %v1216, %v1212
    %v1641 = vpack.c.b16 %v1217, %v1213
    %v1642 = vpack.c.b16 %v1222, %v1218
    %v1643 = vpack.c.b16 %v1223, %v1219
    %v1644 = vpack.c.b16 %v1224, %v1220
    %v1645 = vpack.c.b16 %v1225, %v1221
    %v1646 = vpack.c.b16 %v1230, %v1226
    %v1647 = vpack.c.b16 %v1231, %v1227
    %v1648 = vpack.c.b16 %v1232, %v1228
    %v1649 = vpack.c.b16 %v1233, %v1229
    %v1650 = vpack.c.b16 %v1238, %v1234
    %v1651 = vpack.c.b16 %v1239, %v1235
    %v1652 = vpack.c.b16 %v1240, %v1236
    %v1653 = vpack.c.b16 %v1241, %v1237
    %v1654 = vpack.c.b16 %v1246, %v1242
    %v1655 = vpack.c.b16 %v1247, %v1243
    %v1656 = vpack.c.b16 %v1248, %v1244
    %v1657 = vpack.c.b16 %v1249, %v1245
    %v1658 = vpack.c.b16 %v1254, %v1250
    %v1659 = vpack.c.b16 %v1255, %v1251
    %v1660 = vpack.c.b16 %v1256, %v1252
    %v1661 = vpack.c.b16 %v1257, %v1253
    %v1662 = vpack.c.b16 %v1262, %v1258
    %v1663 = vpack.c.b16 %v1263, %v1259
    %v1664 = vpack.c.b16 %v1264, %v1260
    %v1665 = vpack.c.b16 %v1265, %v1261
    %v1666 = vpack.c.b16 %v1270, %v1266
    %v1667 = vpack.c.b16 %v1271, %v1267
    %v1668 = vpack.c.b16 %v1272, %v1268
    %v1669 = vpack.c.b16 %v1273, %v1269
    %v1670 = vpack.c.b16 %v1278, %v1274
    %v1671 = vpack.c.b16 %v1279, %v1275
    %v1672 = vpack.c.b16 %v1280, %v1276
    %v1673 = vpack.c.b16 %v1281, %v1277
    %v1674 = vpack.c.b16 %v1286, %v1282
    %v1675 = vpack.c.b16 %v1287, %v1283
    %v1676 = vpack.c.b16 %v1288, %v1284
    %v1677 = vpack.c.b16 %v1289, %v1285
    %v1678 = vpack.c.b16 %v1294, %v1290
    %v1679 = vpack.c.b16 %v1295, %v1291
    %v1680 = vpack.c.b16 %v1296, %v1292
    %v1681 = vpack.c.b16 %v1297, %v1293
    %v1682 = vpack.c.b16 %v1302, %v1298
    %v1683 = vpack.c.b16 %v1303, %v1299
    %v1684 = vpack.c.b16 %v1304, %v1300
    %v1685 = vpack.c.b16 %v1305, %v1301
    %v1686 = vpack.c.b16 %v1310, %v1306
    %v1687 = vpack.c.b16 %v1311, %v1307
    %v1688 = vpack.c.b16 %v1312, %v1308
    %v1689 = vpack.c.b16 %v1313, %v1309
    %v1690 = vpack.c.b16 %v1318, %v1314
    %v1691 = vpack.c.b16 %v1319, %v1315
    %v1692 = vpack.c.b16 %v1320, %v1316
    %v1693 = vpack.c.b16 %v1321, %v1317
    %v1694 = vpack.c.b16 %v1326, %v1322
    %v1695 = vpack.c.b16 %v1327, %v1323
    %v1696 = vpack.c.b16 %v1328, %v1324
    %v1697 = vpack.c.b16 %v1329, %v1325
    %v1698 = vpack.c.b16 %v1334, %v1330
    %v1699 = vpack.c.b16 %v1335, %v1331
    %v1700 = vpack.c.b16 %v1336, %v1332
    %v1701 = vpack.c.b16 %v1337, %v1333
    %v1702 = vpack.c.b16 %v1342, %v1338
    %v1703 = vpack.c.b16 %v1343, %v1339
    %v1704 = vpack.c.b16 %v1344, %v1340
    %v1705 = vpack.c.b16 %v1345, %v1341
    %v1706 = vpack.c.b16 %v1350, %v1346
    %v1707 = vpack.c.b16 %v1351, %v1347
    %v1708 = vpack.c.b16 %v1352, %v1348
    %v1709 = vpack.c.b16 %v1353, %v1349
    %v1710 = vpack.c.b16 %v1358, %v1354
    %v1711 = vpack.c.b16 %v1359, %v1355
    %v1712 = vpack.c.b16 %v1360, %v1356
    %v1713 = vpack.c.b16 %v1361, %v1357
    %v1714 = vpack.c.b16 %v1366, %v1362
    %v1715 = vpack.c.b16 %v1367, %v1363
    %v1716 = vpack.c.b16 %v1368, %v1364
    %v1717 = vpack.c.b16 %v1369, %v1365
    %v1718 = vpack.c.b16 %v1374, %v1370
    %v1719 = vpack.c.b16 %v1375, %v1371
    %v1720 = vpack.c.b16 %v1376, %v1372
    %v1721 = vpack.c.b16 %v1377, %v1373
    %v1722 = vpack.c.b16 %v1382, %v1378
    %v1723 = vpack.c.b16 %v1383, %v1379
    %v1724 = vpack.c.b16 %v1384, %v1380
    %v1725 = vpack.c.b16 %v1385, %v1381
    %v1726 = vpack.c.b16 %v1390, %v1386
    %v1727 = vpack.c.b16 %v1391, %v1387
    %v1728 = vpack.c.b16 %v1392, %v1388
    %v1729 = vpack.c.b16 %v1393, %v1389
    %v1730 = vpack.c.b16 %v1398, %v1394
    %v1731 = vpack.c.b16 %v1399, %v1395
    %v1732 = vpack.c.b16 %v1400, %v1396
    %v1733 = vpack.c.b16 %v1401, %v1397
    %v1734 = vpack.c.b16 %v1406, %v1402
    %v1735 = vpack.c.b16 %v1407, %v1403
    %v1736 = vpack.c.b16 %v1408, %v1404
    %v1737 = vpack.c.b16 %v1409, %v1405
    %v1738 = vpack.c.b16 %v1414, %v1410
    %v1739 = vpack.c.b16 %v1415, %v1411
    %v1740 = vpack.c.b16 %v1416, %v1412
    %v1741 = vpack.c.b16 %v1417, %v1413
    %v1742 = vpack.c.b16 %v1422, %v1418
    %v1743 = vpack.c.b16 %v1423, %v1419
    %v1744 = vpack.c.b16 %v1424, %v1420
    %v1745 = vpack.c.b16 %v1425, %v1421
    %2066 = vmatprep.subr.bf16.mxu0 %v1455
    %2067 = vmatpush1.bf16.msra.mxu0 %v1454
    %2068 = vmatprep.subr.bf16.mxu0 %v1451
    %2069 = vmatpush1.bf16.msra.mxu0 %v1450
    %2070 = vmatprep.subr.bf16.mxu0 %v1447
    %2071 = vmatpush1.bf16.msra.mxu0 %v1446
    %2072 = vmatprep.subr.bf16.mxu0 %v1443
    %2073 = vmatpush1.bf16.msra.mxu0 %v1442
    %2074 = vmatprep.subr.bf16.mxu0 %v1439
    %2075 = vmatpush1.bf16.msra.mxu0 %v1438
    %2076 = vmatprep.subr.bf16.mxu0 %v1435
    %2077 = vmatpush1.bf16.msra.mxu0 %v1434
    %2078 = vmatprep.subr.bf16.mxu0 %v1431
    %2079 = vmatpush1.bf16.msra.mxu0 %v1430
    %2080 = vmatprep.subr.bf16.mxu0 %v1427
    %2081 = vmatpush1.bf16.msra.mxu0 %v1426
    %2082 = vmatprep.subr.bf16.mxu0 %v1487
    %2083 = vmatpush2.bf16.msra.mxu0 %v1486
    %2084 = vmatprep.subr.bf16.mxu0 %v1483
    %2085 = vmatpush2.bf16.msra.mxu0 %v1482
    %2086 = vmatprep.subr.bf16.mxu0 %v1479
    %2087 = vmatpush2.bf16.msra.mxu0 %v1478
    %2088 = vmatprep.subr.bf16.mxu0 %v1475
    %2089 = vmatpush2.bf16.msra.mxu0 %v1474
    %2090 = vmatprep.subr.bf16.mxu0 %v1471
    %2091 = vmatpush2.bf16.msra.mxu0 %v1470
    %2092 = vmatprep.subr.bf16.mxu0 %v1467
    %2093 = vmatpush2.bf16.msra.mxu0 %v1466
    %2094 = vmatprep.subr.bf16.mxu0 %v1463
    %2095 = vmatpush2.bf16.msra.mxu0 %v1462
    %2096 = vmatprep.subr.bf16.mxu0 %v1459
    %2097 = vmatpush2.bf16.msra.mxu0 %v1458
    %2098 = vmatprep.mubr.bf16.mxu0 %v447
    %2099 = vmatmul.mubr.bf16.gmra.mxu0 %v446
    %v2100 = vpop.f32.mrf.mxu0
    %v2101 = vadd.f32 %v414, %v2100
    %v2102 = vpop.f32.mrf.mxu0
    %v2103 = vadd.f32 %v418, %v2102
    %v2104 = vpop.f32.mrf.mxu0
    %v2105 = vpop.f32.mrf.mxu0
    %2106 = vdwg.mxu0
    %2107 = vmatprep.subr.bf16.mxu0 %v1519
    %2108 = vmatpush1.bf16.msra.mxu0 %v1518
    %2109 = vmatprep.subr.bf16.mxu0 %v1515
    %2110 = vmatpush1.bf16.msra.mxu0 %v1514
    %2111 = vmatprep.subr.bf16.mxu0 %v1511
    %2112 = vmatpush1.bf16.msra.mxu0 %v1510
    %2113 = vmatprep.subr.bf16.mxu0 %v1507
    %2114 = vmatpush1.bf16.msra.mxu0 %v1506
    %2115 = vmatprep.subr.bf16.mxu0 %v1503
    %2116 = vmatpush1.bf16.msra.mxu0 %v1502
    %2117 = vmatprep.subr.bf16.mxu0 %v1499
    %2118 = vmatpush1.bf16.msra.mxu0 %v1498
    %2119 = vmatprep.subr.bf16.mxu0 %v1495
    %2120 = vmatpush1.bf16.msra.mxu0 %v1494
    %2121 = vmatprep.subr.bf16.mxu0 %v1491
    %2122 = vmatpush1.bf16.msra.mxu0 %v1490
    %2123 = vmatprep.subr.bf16.mxu0 %v1551
    %2124 = vmatpush2.bf16.msra.mxu0 %v1550
    %2125 = vmatprep.subr.bf16.mxu0 %v1547
    %2126 = vmatpush2.bf16.msra.mxu0 %v1546
    %2127 = vmatprep.subr.bf16.mxu0 %v1543
    %2128 = vmatpush2.bf16.msra.mxu0 %v1542
    %2129 = vmatprep.subr.bf16.mxu0 %v1539
    %2130 = vmatpush2.bf16.msra.mxu0 %v1538
    %2131 = vmatprep.subr.bf16.mxu0 %v1535
    %2132 = vmatpush2.bf16.msra.mxu0 %v1534
    %2133 = vmatprep.subr.bf16.mxu0 %v1531
    %2134 = vmatpush2.bf16.msra.mxu0 %v1530
    %2135 = vmatprep.subr.bf16.mxu0 %v1527
    %2136 = vmatpush2.bf16.msra.mxu0 %v1526
    %2137 = vmatprep.subr.bf16.mxu0 %v1523
    %2138 = vmatpush2.bf16.msra.mxu0 %v1522
    %2139 = vmatprep.mubr.bf16.mxu0 %v449
    %2140 = vmatmul.mubr.bf16.gmra.mxu0 %v448
    %v2141 = vpop.f32.mrf.mxu0
    %v2142 = vadd.f32 %v2101, %v2141
    %v2143 = vpop.f32.mrf.mxu0
    %v2144 = vadd.f32 %v2103, %v2143
    %v2145 = vpop.f32.mrf.mxu0
    %v2146 = vpop.f32.mrf.mxu0
    %2147 = vdwg.mxu0
    %2148 = vmatprep.subr.bf16.mxu0 %v1583
    %2149 = vmatpush1.bf16.msra.mxu0 %v1582
    %2150 = vmatprep.subr.bf16.mxu0 %v1579
    %2151 = vmatpush1.bf16.msra.mxu0 %v1578
    %2152 = vmatprep.subr.bf16.mxu0 %v1575
    %2153 = vmatpush1.bf16.msra.mxu0 %v1574
    %2154 = vmatprep.subr.bf16.mxu0 %v1571
    %2155 = vmatpush1.bf16.msra.mxu0 %v1570
    %2156 = vmatprep.subr.bf16.mxu0 %v1567
    %2157 = vmatpush1.bf16.msra.mxu0 %v1566
    %2158 = vmatprep.subr.bf16.mxu0 %v1563
    %2159 = vmatpush1.bf16.msra.mxu0 %v1562
    %2160 = vmatprep.subr.bf16.mxu0 %v1559
    %2161 = vmatpush1.bf16.msra.mxu0 %v1558
    %2162 = vmatprep.subr.bf16.mxu0 %v1555
    %2163 = vmatpush1.bf16.msra.mxu0 %v1554
    %2164 = vmatprep.subr.bf16.mxu0 %v1615
    %2165 = vmatpush2.bf16.msra.mxu0 %v1614
    %2166 = vmatprep.subr.bf16.mxu0 %v1611
    %2167 = vmatpush2.bf16.msra.mxu0 %v1610
    %2168 = vmatprep.subr.bf16.mxu0 %v1607
    %2169 = vmatpush2.bf16.msra.mxu0 %v1606
    %2170 = vmatprep.subr.bf16.mxu0 %v1603
    %2171 = vmatpush2.bf16.msra.mxu0 %v1602
    %2172 = vmatprep.subr.bf16.mxu0 %v1599
    %2173 = vmatpush2.bf16.msra.mxu0 %v1598
    %2174 = vmatprep.subr.bf16.mxu0 %v1595
    %2175 = vmatpush2.bf16.msra.mxu0 %v1594
    %2176 = vmatprep.subr.bf16.mxu0 %v1591
    %2177 = vmatpush2.bf16.msra.mxu0 %v1590
    %2178 = vmatprep.subr.bf16.mxu0 %v1587
    %2179 = vmatpush2.bf16.msra.mxu0 %v1586
    %2180 = vmatprep.mubr.bf16.mxu0 %v451
    %2181 = vmatmul.mubr.bf16.gmra.mxu0 %v450
    %v2182 = vpop.f32.mrf.mxu0
    %v2183 = vadd.f32 %v2142, %v2182
    %v2184 = vpop.f32.mrf.mxu0
    %v2185 = vadd.f32 %v2144, %v2184
    %v2186 = vpop.f32.mrf.mxu0
    %v2187 = vpop.f32.mrf.mxu0
    %2188 = vdwg.mxu0
    %2189 = vmatprep.subr.bf16.mxu0 %v1647
    %2190 = vmatpush1.bf16.msra.mxu0 %v1646
    %2191 = vmatprep.subr.bf16.mxu0 %v1643
    %2192 = vmatpush1.bf16.msra.mxu0 %v1642
    %2193 = vmatprep.subr.bf16.mxu0 %v1639
    %2194 = vmatpush1.bf16.msra.mxu0 %v1638
    %2195 = vmatprep.subr.bf16.mxu0 %v1635
    %2196 = vmatpush1.bf16.msra.mxu0 %v1634
    %2197 = vmatprep.subr.bf16.mxu0 %v1631
    %2198 = vmatpush1.bf16.msra.mxu0 %v1630
    %2199 = vmatprep.subr.bf16.mxu0 %v1627
    %2200 = vmatpush1.bf16.msra.mxu0 %v1626
    %2201 = vmatprep.subr.bf16.mxu0 %v1623
    %2202 = vmatpush1.bf16.msra.mxu0 %v1622
    %2203 = vmatprep.subr.bf16.mxu0 %v1619
    %2204 = vmatpush1.bf16.msra.mxu0 %v1618
    %2205 = vmatprep.subr.bf16.mxu0 %v1679
    %2206 = vmatpush2.bf16.msra.mxu0 %v1678
    %2207 = vmatprep.subr.bf16.mxu0 %v1675
    %2208 = vmatpush2.bf16.msra.mxu0 %v1674
    %2209 = vmatprep.subr.bf16.mxu0 %v1671
    %2210 = vmatpush2.bf16.msra.mxu0 %v1670
    %2211 = vmatprep.subr.bf16.mxu0 %v1667
    %2212 = vmatpush2.bf16.msra.mxu0 %v1666
    %2213 = vmatprep.subr.bf16.mxu0 %v1663
    %2214 = vmatpush2.bf16.msra.mxu0 %v1662
    %2215 = vmatprep.subr.bf16.mxu0 %v1659
    %2216 = vmatpush2.bf16.msra.mxu0 %v1658
    %2217 = vmatprep.subr.bf16.mxu0 %v1655
    %2218 = vmatpush2.bf16.msra.mxu0 %v1654
    %2219 = vmatprep.subr.bf16.mxu0 %v1651
    %2220 = vmatpush2.bf16.msra.mxu0 %v1650
    %2221 = vmatprep.mubr.bf16.mxu0 %v453
    %2222 = vmatmul.mubr.bf16.gmra.mxu0 %v452
    %v2223 = vpop.f32.mrf.mxu0
    %v2224 = vadd.f32 %v2183, %v2223
    %v2225 = vpop.f32.mrf.mxu0
    %v2226 = vadd.f32 %v2185, %v2225
    %v2227 = vpop.f32.mrf.mxu0
    %v2228 = vpop.f32.mrf.mxu0
    %2229 = vdwg.mxu0
    %2230 = vmatprep.subr.bf16.mxu0 %v1711
    %2231 = vmatpush1.bf16.msra.mxu0 %v1710
    %2232 = vmatprep.subr.bf16.mxu0 %v1707
    %2233 = vmatpush1.bf16.msra.mxu0 %v1706
    %2234 = vmatprep.subr.bf16.mxu0 %v1703
    %2235 = vmatpush1.bf16.msra.mxu0 %v1702
    %2236 = vmatprep.subr.bf16.mxu0 %v1699
    %2237 = vmatpush1.bf16.msra.mxu0 %v1698
    %2238 = vmatprep.subr.bf16.mxu0 %v1695
    %2239 = vmatpush1.bf16.msra.mxu0 %v1694
    %2240 = vmatprep.subr.bf16.mxu0 %v1691
    %2241 = vmatpush1.bf16.msra.mxu0 %v1690
    %2242 = vmatprep.subr.bf16.mxu0 %v1687
    %2243 = vmatpush1.bf16.msra.mxu0 %v1686
    %2244 = vmatprep.subr.bf16.mxu0 %v1683
    %2245 = vmatpush1.bf16.msra.mxu0 %v1682
    %2246 = vmatprep.subr.bf16.mxu0 %v1743
    %2247 = vmatpush2.bf16.msra.mxu0 %v1742
    %2248 = vmatprep.subr.bf16.mxu0 %v1739
    %2249 = vmatpush2.bf16.msra.mxu0 %v1738
    %2250 = vmatprep.subr.bf16.mxu0 %v1735
    %2251 = vmatpush2.bf16.msra.mxu0 %v1734
    %2252 = vmatprep.subr.bf16.mxu0 %v1731
    %2253 = vmatpush2.bf16.msra.mxu0 %v1730
    %2254 = vmatprep.subr.bf16.mxu0 %v1727
    %2255 = vmatpush2.bf16.msra.mxu0 %v1726
    %2256 = vmatprep.subr.bf16.mxu0 %v1723
    %2257 = vmatpush2.bf16.msra.mxu0 %v1722
    %2258 = vmatprep.subr.bf16.mxu0 %v1719
    %2259 = vmatpush2.bf16.msra.mxu0 %v1718
    %2260 = vmatprep.subr.bf16.mxu0 %v1715
    %2261 = vmatpush2.bf16.msra.mxu0 %v1714
    %2262 = vmatprep.mubr.bf16.mxu0 %v455
    %2263 = vmatmul.mubr.bf16.gmra.mxu0 %v454
    %v2264 = vpop.f32.mrf.mxu0
    %v2265 = vadd.f32 %v2224, %v2264
    %v2266 = vpop.f32.mrf.mxu0
    %v2267 = vadd.f32 %v2226, %v2266
    %v2268 = vpop.f32.mrf.mxu0
    %v2269 = vpop.f32.mrf.mxu0
    %2270 = vdwg.mxu0
    %2271 = vmatprep.subr.bf16.mxu0 %v1457
    %2272 = vmatpush1.bf16.msra.mxu0 %v1456
    %2273 = vmatprep.subr.bf16.mxu0 %v1453
    %2274 = vmatpush1.bf16.msra.mxu0 %v1452
    %2275 = vmatprep.subr.bf16.mxu0 %v1449
    %2276 = vmatpush1.bf16.msra.mxu0 %v1448
    %2277 = vmatprep.subr.bf16.mxu0 %v1445
    %2278 = vmatpush1.bf16.msra.mxu0 %v1444
    %2279 = vmatprep.subr.bf16.mxu0 %v1441
    %2280 = vmatpush1.bf16.msra.mxu0 %v1440
    %2281 = vmatprep.subr.bf16.mxu0 %v1437
    %2282 = vmatpush1.bf16.msra.mxu0 %v1436
    %2283 = vmatprep.subr.bf16.mxu0 %v1433
    %2284 = vmatpush1.bf16.msra.mxu0 %v1432
    %2285 = vmatprep.subr.bf16.mxu0 %v1429
    %2286 = vmatpush1.bf16.msra.mxu0 %v1428
    %2287 = vmatprep.subr.bf16.mxu0 %v1489
    %2288 = vmatpush2.bf16.msra.mxu0 %v1488
    %2289 = vmatprep.subr.bf16.mxu0 %v1485
    %2290 = vmatpush2.bf16.msra.mxu0 %v1484
    %2291 = vmatprep.subr.bf16.mxu0 %v1481
    %2292 = vmatpush2.bf16.msra.mxu0 %v1480
    %2293 = vmatprep.subr.bf16.mxu0 %v1477
    %2294 = vmatpush2.bf16.msra.mxu0 %v1476
    %2295 = vmatprep.subr.bf16.mxu0 %v1473
    %2296 = vmatpush2.bf16.msra.mxu0 %v1472
    %2297 = vmatprep.subr.bf16.mxu0 %v1469
    %2298 = vmatpush2.bf16.msra.mxu0 %v1468
    %2299 = vmatprep.subr.bf16.mxu0 %v1465
    %2300 = vmatpush2.bf16.msra.mxu0 %v1464
    %2301 = vmatprep.subr.bf16.mxu0 %v1461
    %2302 = vmatpush2.bf16.msra.mxu0 %v1460
    %2303 = vmatprep.mubr.bf16.mxu0 %v447
    %2304 = vmatmul.mubr.bf16.gmra.mxu0 %v446
    %v2305 = vpop.f32.mrf.mxu0
    %v2306 = vadd.f32 %v422, %v2305
    %v2307 = vpop.f32.mrf.mxu0
    %v2308 = vadd.f32 %v426, %v2307
    %v2309 = vpop.f32.mrf.mxu0
    %v2310 = vpop.f32.mrf.mxu0
    %2311 = vdwg.mxu0
    %2312 = vmatprep.subr.bf16.mxu0 %v1521
    %2313 = vmatpush1.bf16.msra.mxu0 %v1520
    %2314 = vmatprep.subr.bf16.mxu0 %v1517
    %2315 = vmatpush1.bf16.msra.mxu0 %v1516
    %2316 = vmatprep.subr.bf16.mxu0 %v1513
    %2317 = vmatpush1.bf16.msra.mxu0 %v1512
    %2318 = vmatprep.subr.bf16.mxu0 %v1509
    %2319 = vmatpush1.bf16.msra.mxu0 %v1508
    %2320 = vmatprep.subr.bf16.mxu0 %v1505
    %2321 = vmatpush1.bf16.msra.mxu0 %v1504
    %2322 = vmatprep.subr.bf16.mxu0 %v1501
    %2323 = vmatpush1.bf16.msra.mxu0 %v1500
    %2324 = vmatprep.subr.bf16.mxu0 %v1497
    %2325 = vmatpush1.bf16.msra.mxu0 %v1496
    %2326 = vmatprep.subr.bf16.mxu0 %v1493
    %2327 = vmatpush1.bf16.msra.mxu0 %v1492
    %2328 = vmatprep.subr.bf16.mxu0 %v1553
    %2329 = vmatpush2.bf16.msra.mxu0 %v1552
    %2330 = vmatprep.subr.bf16.mxu0 %v1549
    %2331 = vmatpush2.bf16.msra.mxu0 %v1548
    %2332 = vmatprep.subr.bf16.mxu0 %v1545
    %2333 = vmatpush2.bf16.msra.mxu0 %v1544
    %2334 = vmatprep.subr.bf16.mxu0 %v1541
    %2335 = vmatpush2.bf16.msra.mxu0 %v1540
    %2336 = vmatprep.subr.bf16.mxu0 %v1537
    %2337 = vmatpush2.bf16.msra.mxu0 %v1536
    %2338 = vmatprep.subr.bf16.mxu0 %v1533
    %2339 = vmatpush2.bf16.msra.mxu0 %v1532
    %2340 = vmatprep.subr.bf16.mxu0 %v1529
    %2341 = vmatpush2.bf16.msra.mxu0 %v1528
    %2342 = vmatprep.subr.bf16.mxu0 %v1525
    %2343 = vmatpush2.bf16.msra.mxu0 %v1524
    %2344 = vmatprep.mubr.bf16.mxu0 %v449
    %2345 = vmatmul.mubr.bf16.gmra.mxu0 %v448
    %v2346 = vpop.f32.mrf.mxu0
    %v2347 = vadd.f32 %v2306, %v2346
    %v2348 = vpop.f32.mrf.mxu0
    %v2349 = vadd.f32 %v2308, %v2348
    %v2350 = vpop.f32.mrf.mxu0
    %v2351 = vpop.f32.mrf.mxu0
    %2352 = vdwg.mxu0
    %2353 = vmatprep.subr.bf16.mxu0 %v1585
    %2354 = vmatpush1.bf16.msra.mxu0 %v1584
    %2355 = vmatprep.subr.bf16.mxu0 %v1581
    %2356 = vmatpush1.bf16.msra.mxu0 %v1580
    %2357 = vmatprep.subr.bf16.mxu0 %v1577
    %2358 = vmatpush1.bf16.msra.mxu0 %v1576
    %2359 = vmatprep.subr.bf16.mxu0 %v1573
    %2360 = vmatpush1.bf16.msra.mxu0 %v1572
    %2361 = vmatprep.subr.bf16.mxu0 %v1569
    %2362 = vmatpush1.bf16.msra.mxu0 %v1568
    %2363 = vmatprep.subr.bf16.mxu0 %v1565
    %2364 = vmatpush1.bf16.msra.mxu0 %v1564
    %2365 = vmatprep.subr.bf16.mxu0 %v1561
    %2366 = vmatpush1.bf16.msra.mxu0 %v1560
    %2367 = vmatprep.subr.bf16.mxu0 %v1557
    %2368 = vmatpush1.bf16.msra.mxu0 %v1556
    %2369 = vmatprep.subr.bf16.mxu0 %v1617
    %2370 = vmatpush2.bf16.msra.mxu0 %v1616
    %2371 = vmatprep.subr.bf16.mxu0 %v1613
    %2372 = vmatpush2.bf16.msra.mxu0 %v1612
    %2373 = vmatprep.subr.bf16.mxu0 %v1609
    %2374 = vmatpush2.bf16.msra.mxu0 %v1608
    %2375 = vmatprep.subr.bf16.mxu0 %v1605
    %2376 = vmatpush2.bf16.msra.mxu0 %v1604
    %2377 = vmatprep.subr.bf16.mxu0 %v1601
    %2378 = vmatpush2.bf16.msra.mxu0 %v1600
    %2379 = vmatprep.subr.bf16.mxu0 %v1597
    %2380 = vmatpush2.bf16.msra.mxu0 %v1596
    %2381 = vmatprep.subr.bf16.mxu0 %v1593
    %2382 = vmatpush2.bf16.msra.mxu0 %v1592
    %2383 = vmatprep.subr.bf16.mxu0 %v1589
    %2384 = vmatpush2.bf16.msra.mxu0 %v1588
    %2385 = vmatprep.mubr.bf16.mxu0 %v451
    %2386 = vmatmul.mubr.bf16.gmra.mxu0 %v450
    %v2387 = vpop.f32.mrf.mxu0
    %v2388 = vadd.f32 %v2347, %v2387
    %v2389 = vpop.f32.mrf.mxu0
    %v2390 = vadd.f32 %v2349, %v2389
    %v2391 = vpop.f32.mrf.mxu0
    %v2392 = vpop.f32.mrf.mxu0
    %2393 = vdwg.mxu0
    %2394 = vmatprep.subr.bf16.mxu0 %v1649
    %2395 = vmatpush1.bf16.msra.mxu0 %v1648
    %2396 = vmatprep.subr.bf16.mxu0 %v1645
    %2397 = vmatpush1.bf16.msra.mxu0 %v1644
    %2398 = vmatprep.subr.bf16.mxu0 %v1641
    %2399 = vmatpush1.bf16.msra.mxu0 %v1640
    %2400 = vmatprep.subr.bf16.mxu0 %v1637
    %2401 = vmatpush1.bf16.msra.mxu0 %v1636
    %2402 = vmatprep.subr.bf16.mxu0 %v1633
    %2403 = vmatpush1.bf16.msra.mxu0 %v1632
    %2404 = vmatprep.subr.bf16.mxu0 %v1629
    %2405 = vmatpush1.bf16.msra.mxu0 %v1628
    %2406 = vmatprep.subr.bf16.mxu0 %v1625
    %2407 = vmatpush1.bf16.msra.mxu0 %v1624
    %2408 = vmatprep.subr.bf16.mxu0 %v1621
    %2409 = vmatpush1.bf16.msra.mxu0 %v1620
    %2410 = vmatprep.subr.bf16.mxu0 %v1681
    %2411 = vmatpush2.bf16.msra.mxu0 %v1680
    %2412 = vmatprep.subr.bf16.mxu0 %v1677
    %2413 = vmatpush2.bf16.msra.mxu0 %v1676
    %2414 = vmatprep.subr.bf16.mxu0 %v1673
    %2415 = vmatpush2.bf16.msra.mxu0 %v1672
    %2416 = vmatprep.subr.bf16.mxu0 %v1669
    %2417 = vmatpush2.bf16.msra.mxu0 %v1668
    %2418 = vmatprep.subr.bf16.mxu0 %v1665
    %2419 = vmatpush2.bf16.msra.mxu0 %v1664
    %2420 = vmatprep.subr.bf16.mxu0 %v1661
    %2421 = vmatpush2.bf16.msra.mxu0 %v1660
    %2422 = vmatprep.subr.bf16.mxu0 %v1657
    %2423 = vmatpush2.bf16.msra.mxu0 %v1656
    %2424 = vmatprep.subr.bf16.mxu0 %v1653
    %2425 = vmatpush2.bf16.msra.mxu0 %v1652
    %2426 = vmatprep.mubr.bf16.mxu0 %v453
    %2427 = vmatmul.mubr.bf16.gmra.mxu0 %v452
    %v2428 = vpop.f32.mrf.mxu0
    %v2429 = vadd.f32 %v2388, %v2428
    %v2430 = vpop.f32.mrf.mxu0
    %v2431 = vadd.f32 %v2390, %v2430
    %v2432 = vpop.f32.mrf.mxu0
    %v2433 = vpop.f32.mrf.mxu0
    %2434 = vdwg.mxu0
    %2435 = vmatprep.subr.bf16.mxu0 %v1713
    %2436 = vmatpush1.bf16.msra.mxu0 %v1712
    %2437 = vmatprep.subr.bf16.mxu0 %v1709
    %2438 = vmatpush1.bf16.msra.mxu0 %v1708
    %2439 = vmatprep.subr.bf16.mxu0 %v1705
    %2440 = vmatpush1.bf16.msra.mxu0 %v1704
    %2441 = vmatprep.subr.bf16.mxu0 %v1701
    %2442 = vmatpush1.bf16.msra.mxu0 %v1700
    %2443 = vmatprep.subr.bf16.mxu0 %v1697
    %2444 = vmatpush1.bf16.msra.mxu0 %v1696
    %2445 = vmatprep.subr.bf16.mxu0 %v1693
    %2446 = vmatpush1.bf16.msra.mxu0 %v1692
    %2447 = vmatprep.subr.bf16.mxu0 %v1689
    %2448 = vmatpush1.bf16.msra.mxu0 %v1688
    %2449 = vmatprep.subr.bf16.mxu0 %v1685
    %2450 = vmatpush1.bf16.msra.mxu0 %v1684
    %2451 = vmatprep.subr.bf16.mxu0 %v1745
    %2452 = vmatpush2.bf16.msra.mxu0 %v1744
    %2453 = vmatprep.subr.bf16.mxu0 %v1741
    %2454 = vmatpush2.bf16.msra.mxu0 %v1740
    %2455 = vmatprep.subr.bf16.mxu0 %v1737
    %2456 = vmatpush2.bf16.msra.mxu0 %v1736
    %2457 = vmatprep.subr.bf16.mxu0 %v1733
    %2458 = vmatpush2.bf16.msra.mxu0 %v1732
    %2459 = vmatprep.subr.bf16.mxu0 %v1729
    %2460 = vmatpush2.bf16.msra.mxu0 %v1728
    %2461 = vmatprep.subr.bf16.mxu0 %v1725
    %2462 = vmatpush2.bf16.msra.mxu0 %v1724
    %2463 = vmatprep.subr.bf16.mxu0 %v1721
    %2464 = vmatpush2.bf16.msra.mxu0 %v1720
    %2465 = vmatprep.subr.bf16.mxu0 %v1717
    %2466 = vmatpush2.bf16.msra.mxu0 %v1716
    %2467 = vmatprep.mubr.bf16.mxu0 %v455
    %2468 = vmatmul.mubr.bf16.gmra.mxu0 %v454
    %v2469 = vpop.f32.mrf.mxu0
    %v2470 = vadd.f32 %v2429, %v2469
    %v2471 = vpop.f32.mrf.mxu0
    %v2472 = vadd.f32 %v2431, %v2471
    %v2473 = vpop.f32.mrf.mxu0
    %v2474 = vpop.f32.mrf.mxu0
    %2475 = vdwg.mxu0
    %v2476 = vxor.u32 %v2265, 2147483648
    %v2477 = vxor.u32 %v2267, 2147483648
    %v2478 = vxor.u32 %v2470, 2147483648
    %v2479 = vxor.u32 %v2472, 2147483648
    %v2480 = vmul.f32 %v2476, 1.442695
    %v2481 = vpow.pop %v2480
    %v2482 = vmul.f32 %v2477, 1.442695
    %v2483 = vpow.pop %v2482
    %v2484 = vmul.f32 %v2478, 1.442695
    %v2485 = vpow.pop %v2484
    %v2486 = vmul.f32 %v2479, 1.442695
    %v2487 = vpow.pop %v2486
    %v2488 = vadd.f32 %v2481, 1.0
    %v2489 = vadd.f32 %v2483, 1.0
    %v2490 = vadd.f32 %v2485, 1.0
    %v2491 = vadd.f32 %v2487, 1.0
    %v2492 = vrcp.pop %v2488
    %v2493 = vmul.f32 1.0, %v2492
    %v2494 = vrcp.pop %v2489
    %v2495 = vmul.f32 1.0, %v2494
    %v2496 = vrcp.pop %v2490
    %v2497 = vmul.f32 1.0, %v2496
    %v2498 = vrcp.pop %v2491
    %v2499 = vmul.f32 1.0, %v2498
    %v2500 = vmul.f32 %v2265, %v2493
    %v2501 = vmul.f32 %v2267, %v2495
    %v2502 = vmul.f32 %v2470, %v2497
    %v2503 = vmul.f32 %v2472, %v2499
    %v2504 = vpack.c.bf16 %v2500, %v2500
    %v2505 = vpack.c.bf16 %v2501, %v2501
    %v2506 = vpack.c.bf16 %v2502, %v2502
    %v2507 = vpack.c.bf16 %v2503, %v2503
    %v2508 = vld [vmem:[#allocation8] sm:$0xf]
    %v2509 = vld [vmem:[#allocation8 + $0x4] sm:$0xf]
    %v2510 = vld [vmem:[#allocation8 + $0x8] sm:$0xf]
    %v2511 = vld [vmem:[#allocation8 + $0xc] sm:$0xf]
    %v2512 = vld [vmem:[#allocation8 + $0x10] sm:$0xf]
    %v2513 = vld [vmem:[#allocation8 + $0x14] sm:$0xf]
    %v2514 = vld [vmem:[#allocation8 + $0x18] sm:$0xf]
    %v2515 = vld [vmem:[#allocation8 + $0x1c] sm:$0xf]
    %v2516 = vld [vmem:[#allocation8 + $0x20] sm:$0xf]
    %v2517 = vld [vmem:[#allocation8 + $0x24] sm:$0xf]
    %v2518 = vld [vmem:[#allocation8 + $0x28] sm:$0xf]
    %v2519 = vld [vmem:[#allocation8 + $0x2c] sm:$0xf]
    %v2520 = vld [vmem:[#allocation8 + $0x30] sm:$0xf]
    %v2521 = vld [vmem:[#allocation8 + $0x34] sm:$0xf]
    %v2522 = vld [vmem:[#allocation8 + $0x38] sm:$0xf]
    %v2523 = vld [vmem:[#allocation8 + $0x3c] sm:$0xf]
    %v2524 = vld [vmem:[#allocation8 + $0x40] sm:$0xf]
    %v2525 = vld [vmem:[#allocation8 + $0x44] sm:$0xf]
    %v2526 = vld [vmem:[#allocation8 + $0x48] sm:$0xf]
    %v2527 = vld [vmem:[#allocation8 + $0x4c] sm:$0xf]
    %v2528 = vld [vmem:[#allocation8 + $0x50] sm:$0xf]
    %v2529 = vld [vmem:[#allocation8 + $0x54] sm:$0xf]
    %v2530 = vld [vmem:[#allocation8 + $0x58] sm:$0xf]
    %v2531 = vld [vmem:[#allocation8 + $0x5c] sm:$0xf]
    %v2532 = vld [vmem:[#allocation8 + $0x60] sm:$0xf]
    %v2533 = vld [vmem:[#allocation8 + $0x64] sm:$0xf]
    %v2534 = vld [vmem:[#allocation8 + $0x68] sm:$0xf]
    %v2535 = vld [vmem:[#allocation8 + $0x6c] sm:$0xf]
    %v2536 = vld [vmem:[#allocation8 + $0x70] sm:$0xf]
    %v2537 = vld [vmem:[#allocation8 + $0x74] sm:$0xf]
    %v2538 = vld [vmem:[#allocation8 + $0x78] sm:$0xf]
    %v2539 = vld [vmem:[#allocation8 + $0x7c] sm:$0xf]
    %v2540 = vld [vmem:[#allocation8 + $0x80] sm:$0xf]
    %v2541 = vld [vmem:[#allocation8 + $0x84] sm:$0xf]
    %v2542 = vld [vmem:[#allocation8 + $0x88] sm:$0xf]
    %v2543 = vld [vmem:[#allocation8 + $0x8c] sm:$0xf]
    %v2544 = vld [vmem:[#allocation8 + $0x90] sm:$0xf]
    %v2545 = vld [vmem:[#allocation8 + $0x94] sm:$0xf]
    %v2546 = vld [vmem:[#allocation8 + $0x98] sm:$0xf]
    %v2547 = vld [vmem:[#allocation8 + $0x9c] sm:$0xf]
    %v2548 = vld [vmem:[#allocation8 + $0xa0] sm:$0xf]
    %v2549 = vld [vmem:[#allocation8 + $0xa4] sm:$0xf]
    %v2550 = vld [vmem:[#allocation8 + $0xa8] sm:$0xf]
    %v2551 = vld [vmem:[#allocation8 + $0xac] sm:$0xf]
    %v2552 = vld [vmem:[#allocation8 + $0xb0] sm:$0xf]
    %v2553 = vld [vmem:[#allocation8 + $0xb4] sm:$0xf]
    %v2554 = vld [vmem:[#allocation8 + $0xb8] sm:$0xf]
    %v2555 = vld [vmem:[#allocation8 + $0xbc] sm:$0xf]
    %v2556 = vld [vmem:[#allocation8 + $0xc0] sm:$0xf]
    %v2557 = vld [vmem:[#allocation8 + $0xc4] sm:$0xf]
    %v2558 = vld [vmem:[#allocation8 + $0xc8] sm:$0xf]
    %v2559 = vld [vmem:[#allocation8 + $0xcc] sm:$0xf]
    %v2560 = vld [vmem:[#allocation8 + $0xd0] sm:$0xf]
    %v2561 = vld [vmem:[#allocation8 + $0xd4] sm:$0xf]
    %v2562 = vld [vmem:[#allocation8 + $0xd8] sm:$0xf]
    %v2563 = vld [vmem:[#allocation8 + $0xdc] sm:$0xf]
    %v2564 = vld [vmem:[#allocation8 + $0xe0] sm:$0xf]
    %v2565 = vld [vmem:[#allocation8 + $0xe4] sm:$0xf]
    %v2566 = vld [vmem:[#allocation8 + $0xe8] sm:$0xf]
    %v2567 = vld [vmem:[#allocation8 + $0xec] sm:$0xf]
    %v2568 = vld [vmem:[#allocation8 + $0xf0] sm:$0xf]
    %v2569 = vld [vmem:[#allocation8 + $0xf4] sm:$0xf]
    %v2570 = vld [vmem:[#allocation8 + $0xf8] sm:$0xf]
    %v2571 = vld [vmem:[#allocation8 + $0xfc] sm:$0xf]
    %v2572 = vld [vmem:[#allocation10] sm:$0x1]
    %v2574 = vlaneseq
    %v2575 = vshrl.u32 %v2574, 7
    %v2576 = vsub.s32 0, %v2575
    %v2577 = vrot.slane %v2572, %v2576
    %v2643 = vunpack.c.l.b16 %v2508
    %v2644 = vunpack.c.l.b16 %v2509
    %v2645 = vunpack.c.l.b16 %v2510
    %v2646 = vunpack.c.l.b16 %v2511
    %v2647 = vunpack.c.l.b16 %v2512
    %v2648 = vunpack.c.l.b16 %v2513
    %v2649 = vunpack.c.l.b16 %v2514
    %v2650 = vunpack.c.l.b16 %v2515
    %v2651 = vunpack.c.l.b16 %v2516
    %v2652 = vunpack.c.l.b16 %v2517
    %v2653 = vunpack.c.l.b16 %v2518
    %v2654 = vunpack.c.l.b16 %v2519
    %v2655 = vunpack.c.l.b16 %v2520
    %v2656 = vunpack.c.l.b16 %v2521
    %v2657 = vunpack.c.l.b16 %v2522
    %v2658 = vunpack.c.l.b16 %v2523
    %v2659 = vunpack.c.l.b16 %v2524
    %v2660 = vunpack.c.l.b16 %v2525
    %v2661 = vunpack.c.l.b16 %v2526
    %v2662 = vunpack.c.l.b16 %v2527
    %v2663 = vunpack.c.l.b16 %v2528
    %v2664 = vunpack.c.l.b16 %v2529
    %v2665 = vunpack.c.l.b16 %v2530
    %v2666 = vunpack.c.l.b16 %v2531
    %v2667 = vunpack.c.l.b16 %v2532
    %v2668 = vunpack.c.l.b16 %v2533
    %v2669 = vunpack.c.l.b16 %v2534
    %v2670 = vunpack.c.l.b16 %v2535
    %v2671 = vunpack.c.l.b16 %v2536
    %v2672 = vunpack.c.l.b16 %v2537
    %v2673 = vunpack.c.l.b16 %v2538
    %v2674 = vunpack.c.l.b16 %v2539
    %v2675 = vunpack.c.l.b16 %v2540
    %v2676 = vunpack.c.l.b16 %v2541
    %v2677 = vunpack.c.l.b16 %v2542
    %v2678 = vunpack.c.l.b16 %v2543
    %v2679 = vunpack.c.l.b16 %v2544
    %v2680 = vunpack.c.l.b16 %v2545
    %v2681 = vunpack.c.l.b16 %v2546
    %v2682 = vunpack.c.l.b16 %v2547
    %v2683 = vunpack.c.l.b16 %v2548
    %v2684 = vunpack.c.l.b16 %v2549
    %v2685 = vunpack.c.l.b16 %v2550
    %v2686 = vunpack.c.l.b16 %v2551
    %v2687 = vunpack.c.l.b16 %v2552
    %v2688 = vunpack.c.l.b16 %v2553
    %v2689 = vunpack.c.l.b16 %v2554
    %v2690 = vunpack.c.l.b16 %v2555
    %v2691 = vunpack.c.l.b16 %v2556
    %v2692 = vunpack.c.l.b16 %v2557
    %v2693 = vunpack.c.l.b16 %v2558
    %v2694 = vunpack.c.l.b16 %v2559
    %v2695 = vunpack.c.l.b16 %v2560
    %v2696 = vunpack.c.l.b16 %v2561
    %v2697 = vunpack.c.l.b16 %v2562
    %v2698 = vunpack.c.l.b16 %v2563
    %v2699 = vunpack.c.l.b16 %v2564
    %v2700 = vunpack.c.l.b16 %v2565
    %v2701 = vunpack.c.l.b16 %v2566
    %v2702 = vunpack.c.l.b16 %v2567
    %v2703 = vunpack.c.l.b16 %v2568
    %v2704 = vunpack.c.l.b16 %v2569
    %v2705 = vunpack.c.l.b16 %v2570
    %v2706 = vunpack.c.l.b16 %v2571
    %v2707 = vpack.c.b16 %v2644, %v2643
    %v2708 = vpack.c.b16 %v2646, %v2645
    %v2709 = vpack.c.b16 %v2648, %v2647
    %v2710 = vpack.c.b16 %v2650, %v2649
    %v2711 = vpack.c.b16 %v2652, %v2651
    %v2712 = vpack.c.b16 %v2654, %v2653
    %v2713 = vpack.c.b16 %v2656, %v2655
    %v2714 = vpack.c.b16 %v2658, %v2657
    %v2715 = vpack.c.b16 %v2660, %v2659
    %v2716 = vpack.c.b16 %v2662, %v2661
    %v2717 = vpack.c.b16 %v2664, %v2663
    %v2718 = vpack.c.b16 %v2666, %v2665
    %v2719 = vpack.c.b16 %v2668, %v2667
    %v2720 = vpack.c.b16 %v2670, %v2669
    %v2721 = vpack.c.b16 %v2672, %v2671
    %v2722 = vpack.c.b16 %v2674, %v2673
    %v2723 = vpack.c.b16 %v2676, %v2675
    %v2724 = vpack.c.b16 %v2678, %v2677
    %v2725 = vpack.c.b16 %v2680, %v2679
    %v2726 = vpack.c.b16 %v2682, %v2681
    %v2727 = vpack.c.b16 %v2684, %v2683
    %v2728 = vpack.c.b16 %v2686, %v2685
    %v2729 = vpack.c.b16 %v2688, %v2687
    %v2730 = vpack.c.b16 %v2690, %v2689
    %v2731 = vpack.c.b16 %v2692, %v2691
    %v2732 = vpack.c.b16 %v2694, %v2693
    %v2733 = vpack.c.b16 %v2696, %v2695
    %v2734 = vpack.c.b16 %v2698, %v2697
    %v2735 = vpack.c.b16 %v2700, %v2699
    %v2736 = vpack.c.b16 %v2702, %v2701
    %v2737 = vpack.c.b16 %v2704, %v2703
    %v2738 = vpack.c.b16 %v2706, %v2705
    %2771 = vmatprep.subr.bf16.mxu0 0
    %2772 = vmatpush1.bf16.msra.mxu0 %v2714
    %2773 = vmatprep.subr.bf16.mxu0 0
    %2774 = vmatpush1.bf16.msra.mxu0 %v2713
    %2775 = vmatprep.subr.bf16.mxu0 0
    %2776 = vmatpush1.bf16.msra.mxu0 %v2712
    %2777 = vmatprep.subr.bf16.mxu0 0
    %2778 = vmatpush1.bf16.msra.mxu0 %v2711
    %2779 = vmatprep.subr.bf16.mxu0 0
    %2780 = vmatpush1.bf16.msra.mxu0 %v2710
    %2781 = vmatprep.subr.bf16.mxu0 0
    %2782 = vmatpush1.bf16.msra.mxu0 %v2709
    %2783 = vmatprep.subr.bf16.mxu0 0
    %2784 = vmatpush1.bf16.msra.mxu0 %v2708
    %2785 = vmatprep.subr.bf16.mxu0 0
    %2786 = vmatpush1.bf16.msra.mxu0 %v2707
    %2787 = vmatprep.subr.bf16.mxu0 0
    %2788 = vmatpush2.bf16.msra.mxu0 %v2722
    %2789 = vmatprep.subr.bf16.mxu0 0
    %2790 = vmatpush2.bf16.msra.mxu0 %v2721
    %2791 = vmatprep.subr.bf16.mxu0 0
    %2792 = vmatpush2.bf16.msra.mxu0 %v2720
    %2793 = vmatprep.subr.bf16.mxu0 0
    %2794 = vmatpush2.bf16.msra.mxu0 %v2719
    %2795 = vmatprep.subr.bf16.mxu0 0
    %2796 = vmatpush2.bf16.msra.mxu0 %v2718
    %2797 = vmatprep.subr.bf16.mxu0 0
    %2798 = vmatpush2.bf16.msra.mxu0 %v2717
    %2799 = vmatprep.subr.bf16.mxu0 0
    %2800 = vmatpush2.bf16.msra.mxu0 %v2716
    %2801 = vmatprep.subr.bf16.mxu0 0
    %2802 = vmatpush2.bf16.msra.mxu0 %v2715
    %2803 = vmatprep.mubr.bf16.mxu0 %v2505
    %2804 = vmatmul.mubr.bf16.gmra.mxu0 %v2504
    %v2805 = vpop.f32.mrf.mxu0
    %v2806 = vadd.f32 %v2577, %v2805
    %v2807 = vpop.f32.mrf.mxu0
    %v2808 = vpop.f32.mrf.mxu0
    %v2809 = vpop.f32.mrf.mxu0
    %2810 = vdwg.mxu0
    %2811 = vmatprep.subr.bf16.mxu0 0
    %2812 = vmatpush1.bf16.msra.mxu0 %v2730
    %2813 = vmatprep.subr.bf16.mxu0 0
    %2814 = vmatpush1.bf16.msra.mxu0 %v2729
    %2815 = vmatprep.subr.bf16.mxu0 0
    %2816 = vmatpush1.bf16.msra.mxu0 %v2728
    %2817 = vmatprep.subr.bf16.mxu0 0
    %2818 = vmatpush1.bf16.msra.mxu0 %v2727
    %2819 = vmatprep.subr.bf16.mxu0 0
    %2820 = vmatpush1.bf16.msra.mxu0 %v2726
    %2821 = vmatprep.subr.bf16.mxu0 0
    %2822 = vmatpush1.bf16.msra.mxu0 %v2725
    %2823 = vmatprep.subr.bf16.mxu0 0
    %2824 = vmatpush1.bf16.msra.mxu0 %v2724
    %2825 = vmatprep.subr.bf16.mxu0 0
    %2826 = vmatpush1.bf16.msra.mxu0 %v2723
    %2827 = vmatprep.subr.bf16.mxu0 0
    %2828 = vmatpush2.bf16.msra.mxu0 %v2738
    %2829 = vmatprep.subr.bf16.mxu0 0
    %2830 = vmatpush2.bf16.msra.mxu0 %v2737
    %2831 = vmatprep.subr.bf16.mxu0 0
    %2832 = vmatpush2.bf16.msra.mxu0 %v2736
    %2833 = vmatprep.subr.bf16.mxu0 0
    %2834 = vmatpush2.bf16.msra.mxu0 %v2735
    %2835 = vmatprep.subr.bf16.mxu0 0
    %2836 = vmatpush2.bf16.msra.mxu0 %v2734
    %2837 = vmatprep.subr.bf16.mxu0 0
    %2838 = vmatpush2.bf16.msra.mxu0 %v2733
    %2839 = vmatprep.subr.bf16.mxu0 0
    %2840 = vmatpush2.bf16.msra.mxu0 %v2732
    %2841 = vmatprep.subr.bf16.mxu0 0
    %2842 = vmatpush2.bf16.msra.mxu0 %v2731
    %2843 = vmatprep.mubr.bf16.mxu0 %v2507
    %2844 = vmatmul.mubr.bf16.gmra.mxu0 %v2506
    %v2845 = vpop.f32.mrf.mxu0
    %v2846 = vadd.f32 %v2806, %v2845
    %v2847 = vpop.f32.mrf.mxu0
    %v2848 = vpop.f32.mrf.mxu0
    %v2849 = vpop.f32.mrf.mxu0
    %2850 = vdwg.mxu0
    %v2851 = vxor.u32 %v2846, 2147483648
    %v2852 = vmul.f32 %v2851, 1.442695
    %v2853 = vpow.pop %v2852
    %v2854 = vadd.f32 %v2853, 1.0
    %v2855 = vrcp.pop %v2854
    %v2856 = vmul.f32 1.0, %v2855
    %v2857 = vmul.f32 %v2846, %v2856
    %v2858 = vpack.c.bf16 %v2857, %v2857
    %2859 = vst [vmem:[#allocation11] sm:$0xf] %v2858
    // Predicated region
    $region42: #{tpu_custom_call.1} parent=1 // pred_check
      _
    $region43: #{tpu_custom_call.1} parent=1 // pred_check_branch
      %2861 = sbr.rel (0) target = $region45
    $region44: #{tpu_custom_call.1} parent=1 // pred_region
      %s2863 = ssub.s32 64, 64
      %2864 = vsyncadd [#allocation4], %s2863
      %s2866 = sshll.u32 [#allocation11], 4
      %s2867 = int_to_ptr.vmem [resolvable:$true] %s2866
      %2869 = dma.vmem_to_hbm [thread:$0]  %s2867, 64, %s5, [#allocation4]
    $region45: #{tpu_custom_call.1} parent=1 // pred_fallthru
      _
    // Predicated region
    $region46: #{tpu_custom_call.1} parent=1 // pred_check
      _
    $region47: #{tpu_custom_call.1} parent=1 // pred_check_branch
      %2871 = sbr.rel (0) target = $region49
    $region48: #{tpu_custom_call.1} parent=1 // pred_region
      %2872 = dma.done [#allocation4], 64
    $region49: #{tpu_custom_call.1} parent=1 // pred_fallthru
      _
    %2873 = vsyncpa [#allocation3], 1
    %2874 = vsyncpa [#allocation6], 1
    %2875 = vsyncpa [#allocation9], 1
    %2876 = vsyncpa [#allocation4], 1

</llo_original>
